<compile_context>
chip_gen: v7x
topology: tpu7x:2x2x1
jax: 0.10.0
libtpu: 0.0.40
codegen_flags: <defaults>
</compile_context>

<pallas_src>
import functools

import jax
import jax.numpy as jnp
import numpy as np
from jax.experimental import pallas as pl
from jax.experimental.pallas import tpu as pltpu


def _round_up(x, m):
    return ((x + m - 1) // m) * m


# ---------------------------------------------------------------------------
# Kernel 1: relation-summed propagation.
#   out[i, :] = act( sum_r sum_k A[r, i_tile, k_tile] @ B[r, k_tile, :]
#                    + root[i_tile, :] + bias )
# ---------------------------------------------------------------------------
def _rgcn_propagate_kernel(a_ref, b_ref, root_ref, bias_ref, o_ref, acc_ref,
                           *, apply_leaky_relu, negative_slope):
    r = pl.program_id(1)
    k = pl.program_id(2)

    @pl.when(jnp.logical_and(r == 0, k == 0))
    def _():
        acc_ref[...] = jnp.zeros_like(acc_ref)

    acc_ref[...] += jnp.dot(a_ref[...], b_ref[...],
                            preferred_element_type=jnp.float32)

    @pl.when(jnp.logical_and(r == pl.num_programs(1) - 1,
                             k == pl.num_programs(2) - 1))
    def _():
        y = acc_ref[...] + root_ref[...].astype(jnp.float32) + bias_ref[...]
        if apply_leaky_relu:
            y = jnp.where(y >= 0, y, negative_slope * y)
        o_ref[...] = y.astype(o_ref.dtype)


def rgcn_propagate(adj, rel_feats, root_term, bias, *, apply_leaky_relu,
                   negative_slope, out_dtype, tm, tk):
    """adj: [R, Np, Np] bf16, rel_feats: [R, Np, H] bf16,
       root_term: [Np, H] bf16, bias: [1, H] f32  ->  [Np, H] out_dtype."""
    num_rels, n_pad, _ = adj.shape
    h_pad = rel_feats.shape[-1]
    grid = (n_pad // tm, num_rels, n_pad // tk)

    kernel = functools.partial(_rgcn_propagate_kernel,
                               apply_leaky_relu=apply_leaky_relu,
                               negative_slope=negative_slope)

    return pl.pallas_call(
        kernel,
        out_shape=jax.ShapeDtypeStruct((n_pad, h_pad), out_dtype),
        grid_spec=pltpu.PrefetchScalarGridSpec(
            num_scalar_prefetch=0,
            grid=grid,
            in_specs=[
                pl.BlockSpec((None, tm, tk), lambda i, r, k: (r, i, k)),
                pl.BlockSpec((None, tk, h_pad), lambda i, r, k: (r, k, 0)),
                pl.BlockSpec((tm, h_pad), lambda i, r, k: (i, 0)),
                pl.BlockSpec((1, h_pad), lambda i, r, k: (0, 0)),
            ],
            out_specs=pl.BlockSpec((tm, h_pad), lambda i, r, k: (i, 0)),
            scratch_shapes=[pltpu.VMEM((tm, h_pad), jnp.float32)],
        ),
        compiler_params=pltpu.CompilerParams(
            dimension_semantics=("parallel", "arbitrary", "arbitrary")),
    )(adj, rel_feats, root_term, bias)


# ---------------------------------------------------------------------------
# Kernel 2: per-relation feature transform  XW[g] = x @ W[g]  (batched matmul).
# ---------------------------------------------------------------------------
def _feature_transform_kernel(x_ref, w_ref, o_ref):
    o_ref[...] = jnp.dot(x_ref[...], w_ref[...],
                         preferred_element_type=jnp.float32).astype(o_ref.dtype)


def relation_feature_transform(x, w_stack, *, out_dtype, tm):
    """x: [Np, H] bf16, w_stack: [G, H, H] bf16 -> [G, Np, H] out_dtype."""
    num_mats, h_pad, _ = w_stack.shape
    n_pad = x.shape[0]
    grid = (num_mats, n_pad // tm)
    return pl.pallas_call(
        _feature_transform_kernel,
        out_shape=jax.ShapeDtypeStruct((num_mats, n_pad, h_pad), out_dtype),
        grid_spec=pltpu.PrefetchScalarGridSpec(
            num_scalar_prefetch=0,
            grid=grid,
            in_specs=[
                pl.BlockSpec((tm, h_pad), lambda g, i: (i, 0)),
                pl.BlockSpec((None, h_pad, h_pad), lambda g, i: (g, 0, 0)),
            ],
            out_specs=pl.BlockSpec((None, tm, h_pad), lambda g, i: (g, i, 0)),
        ),
        compiler_params=pltpu.CompilerParams(
            dimension_semantics=("arbitrary", "parallel")),
    )(x, w_stack)


# ---------------------------------------------------------------------------
# Full forward: RGCNConv -> leaky_relu -> RGCNConv
# ---------------------------------------------------------------------------
def rgcn_forward(adj_p, w1_p, root1_p, b1_p, w2_p, root2_p, b2_p,
                 *, negative_slope=0.01):
    n_pad = adj_p.shape[1]
    h_pad = w1_p.shape[-1]
    tm = min(128, n_pad)
    tk = 256 if n_pad % 256 == 0 else 128

    bias1 = b1_p.reshape(1, h_pad).astype(jnp.float32)
    bias2 = b2_p.reshape(1, h_pad).astype(jnp.float32)

    # Layer 1: h = leaky_relu(sum_r A_r @ W1_r + Root1 + b1)
    h = rgcn_propagate(adj_p, w1_p, root1_p, bias1,
                       apply_leaky_relu=True, negative_slope=negative_slope,
                       out_dtype=jnp.bfloat16, tm=tm, tk=tk)

    # Layer 2: out = sum_r A_r @ (h @ W2_r) + h @ Root2 + b2
    w_stack = jnp.concatenate([w2_p, root2_p[None]], axis=0)   # [R+1, H, H]
    xw = relation_feature_transform(h, w_stack, out_dtype=jnp.bfloat16, tm=tm)
    out = rgcn_propagate(adj_p, xw[:-1], xw[-1], bias2,
                         apply_leaky_relu=False, negative_slope=negative_slope,
                         out_dtype=jnp.float32, tm=tm, tk=tk)
    return out


# ---------------------------------------------------------------------------
# Glue (plain JAX): dense normalized adjacency from (edge_index, edge_type).
# ---------------------------------------------------------------------------
def build_dense_adjacency(edge_index, edge_type, num_nodes, num_rels):
    """A[r, i, j] = multiplicity(j->i of type r) / in_degree_r(i)  (mean aggr)."""
    src, dst = edge_index[0], edge_index[1]
    counts = jnp.zeros((num_rels, num_nodes, num_nodes), jnp.float32)
    counts = counts.at[edge_type, dst, src].add(1.0)
    deg = counts.sum(axis=2, keepdims=True)
    return jnp.where(deg > 0, counts / jnp.maximum(deg, 1.0), 0.0)


def rgcn_reference(adj_b, w1_b, root1_b, b1, w2_b, root2_b, b2, negative_slope):
    """Plain-JAX reference mirroring the kernel's bf16 quantization points."""
    a = adj_b.astype(jnp.float32)
    h = jnp.einsum("rij,rjh->ih", a, w1_b.astype(jnp.float32))
    h = h + root1_b.astype(jnp.float32) + b1[None, :]
    h = jnp.where(h >= 0, h, negative_slope * h).astype(jnp.bfloat16)
    hf = h.astype(jnp.float32)
    xw = jnp.einsum("nd,rdh->rnh", hf, w2_b.astype(jnp.float32)).astype(jnp.bfloat16)
    xroot = jnp.dot(hf, root2_b.astype(jnp.float32)).astype(jnp.bfloat16)
    out = jnp.einsum("rij,rjh->ih", a, xw.astype(jnp.float32))
    out = out + xroot.astype(jnp.float32) + b2[None, :]
    return out


if __name__ == "__main__":
    num_nodes, nhid, num_rels, num_edges = 200, 48, 3, 1024
    negative_slope = 0.01

    key = jax.random.PRNGKey(0)
    (k_src, k_dst, k_typ,
     k_w1, k_r1, k_b1, k_w2, k_r2, k_b2) = jax.random.split(key, 9)

    edge_index = jnp.stack([
        jax.random.randint(k_src, (num_edges,), 0, num_nodes),
        jax.random.randint(k_dst, (num_edges,), 0, num_nodes)])
    edge_type = jax.random.randint(k_typ, (num_edges,), 0, num_rels)

    # Parameters (RGCNConv with num_bases=None).
    w1 = 0.05 * jax.random.normal(k_w1, (num_rels, num_nodes, nhid), jnp.float32)
    root1 = 0.05 * jax.random.normal(k_r1, (num_nodes, nhid), jnp.float32)
    b1 = 0.05 * jax.random.normal(k_b1, (nhid,), jnp.float32)
    w2 = 0.10 * jax.random.normal(k_w2, (num_rels, nhid, nhid), jnp.float32)
    root2 = 0.10 * jax.random.normal(k_r2, (nhid, nhid), jnp.float32)
    b2 = 0.10 * jax.random.normal(k_b2, (nhid,), jnp.float32)

    # Dense per-relation adjacency (mean aggregation), streamed in bf16.
    # TODO(synk): for large sparse graphs, replace the dense [R,N,N] adjacency
    # with a scalar-prefetch CSR/gather formulation to cut HBM traffic.
    adj_b = build_dense_adjacency(edge_index, edge_type,
                                  num_nodes, num_rels).astype(jnp.bfloat16)
    w1_b, root1_b = w1.astype(jnp.bfloat16), root1.astype(jnp.bfloat16)
    w2_b, root2_b = w2.astype(jnp.bfloat16), root2.astype(jnp.bfloat16)

    # Pad N and H up to multiples of 128 (lane-dense, MXU-aligned tiles).
    n_pad = _round_up(num_nodes, 128)
    h_pad = _round_up(nhid, 128)
    dn, dh = n_pad - num_nodes, h_pad - nhid
    adj_p = jnp.pad(adj_b, ((0, 0), (0, dn), (0, dn)))
    w1_p = jnp.pad(w1_b, ((0, 0), (0, dn), (0, dh)))
    root1_p = jnp.pad(root1_b, ((0, dn), (0, dh)))
    b1_p = jnp.pad(b1, (0, dh))
    w2_p = jnp.pad(w2_b, ((0, 0), (0, dh), (0, dh)))
    root2_p = jnp.pad(root2_b, ((0, dh), (0, dh)))
    b2_p = jnp.pad(b2, (0, dh))

    fwd = jax.jit(functools.partial(rgcn_forward, negative_slope=negative_slope))
    out_padded = jax.block_until_ready(
        fwd(adj_p, w1_p, root1_p, b1_p, w2_p, root2_p, b2_p))
    out = out_padded[:num_nodes, :nhid]

    ref = jax.block_until_ready(
        rgcn_reference(adj_b, w1_b, root1_b, b1, w2_b, root2_b, b2,
                       negative_slope))

    max_err = float(jnp.max(jnp.abs(out - ref)))
    assert np.allclose(np.asarray(out), np.asarray(ref),
                       rtol=2e-2, atol=2e-2), f"max abs err = {max_err}"
    print("KERNEL_OK")
</pallas_src>

<mosaic_0001>
module attributes {stable_mosaic.version = 11 : i64} {
  func.func @_feature_transform_kernel(%arg0: i32, %arg1: i32, %arg2: memref<128x128xbf16, #tpu.memory_space<vmem>>, %arg3: memref<1x128x128xbf16, #tpu.memory_space<vmem>>, %arg4: memref<1x128x128xbf16, #tpu.memory_space<vmem>>) attributes {dimension_semantics = [#tpu.dimension_semantics<arbitrary>, #tpu.dimension_semantics<parallel>], iteration_bounds = array<i64: 4, 2>, scalar_prefetch = 0 : i64, scratch_operands = 0 : i64, tpu.core_type = #tpu.core_type<tc>, window_params = [{transform_indices = @transform_0, window_bounds = array<i64: 128, 128>}, {transform_indices = @transform_1, window_bounds = array<i64: 1, 128, 128>}, {transform_indices = @transform_2, window_bounds = array<i64: 1, 128, 128>}]} {
    %c0 = arith.constant 0 : index
    %c0_0 = arith.constant 0 : index
    %0 = vector.load %arg2[%c0, %c0_0] : memref<128x128xbf16, #tpu.memory_space<vmem>>, vector<128x128xbf16>
    %c0_1 = arith.constant 0 : index
    %c0_2 = arith.constant 0 : index
    %c0_3 = arith.constant 0 : index
    %1 = vector.load %arg3[%c0_1, %c0_2, %c0_3] : memref<1x128x128xbf16, #tpu.memory_space<vmem>>, vector<1x128x128xbf16>
    %2 = vector.shape_cast %1 : vector<1x128x128xbf16> to vector<128x128xbf16>
    %cst = arith.constant dense<0.000000e+00> : vector<128x128xf32>
    %3 = tpu.matmul %0, %2, %cst {dimension_numbers = #tpu.dot_dimension_numbers<[1], [0], [0], [1], [0, 0, 1, 1], [], []>} : vector<128x128xbf16>, vector<128x128xbf16>, vector<128x128xf32> -> vector<128x128xf32>
    %4 = arith.truncf %3 : vector<128x128xf32> to vector<128x128xbf16>
    %c0_4 = arith.constant 0 : index
    %c0_5 = arith.constant 0 : index
    %c0_6 = arith.constant 0 : index
    %5 = vector.load %arg4[%c0_4, %c0_5, %c0_6] : memref<1x128x128xbf16, #tpu.memory_space<vmem>>, vector<1x128x128xbf16>
    %6 = vector.shape_cast %5 : vector<1x128x128xbf16> to vector<128x128xbf16>
    %7 = vector.shape_cast %4 : vector<128x128xbf16> to vector<1x128x128xbf16>
    tpu.vector_store %arg4[%c0_4, %c0_5, %c0_6], %7 {strides = array<i32>} : memref<1x128x128xbf16, #tpu.memory_space<vmem>>, vector<1x128x128xbf16>,
    return
  }
  func.func @transform_0(%arg0: i32, %arg1: i32) -> (i32, i32) {
    %c0_i32 = arith.constant 0 : i32
    %c0_i32_0 = arith.constant 0 : i32
    return %arg1, %c0_i32 : i32, i32
  }
  func.func @transform_1(%arg0: i32, %arg1: i32) -> (i32, i32, i32) {
    %c0_i32 = arith.constant 0 : i32
    %c0_i32_0 = arith.constant 0 : i32
    %c0_i32_1 = arith.constant 0 : i32
    return %arg0, %c0_i32, %c0_i32_0 : i32, i32, i32
  }
  func.func @transform_2(%arg0: i32, %arg1: i32) -> (i32, i32, i32) {
    %c0_i32 = arith.constant 0 : i32
    %c0_i32_0 = arith.constant 0 : i32
    return %arg0, %arg1, %c0_i32 : i32, i32, i32
  }
}

module attributes {stable_mosaic.version = 11 : i64} {
  func.func @_rgcn_propagate_kernel(%arg0: i32, %arg1: i32, %arg2: i32, %arg3: memref<1x128x256xbf16, #tpu.memory_space<vmem>>, %arg4: memref<1x256x128xbf16, #tpu.memory_space<vmem>>, %arg5: memref<128x128xbf16, #tpu.memory_space<vmem>>, %arg6: memref<1x128xf32, #tpu.memory_space<vmem>>, %arg7: memref<128x128xbf16, #tpu.memory_space<vmem>>, %arg8: memref<128x128xf32, #tpu.memory_space<vmem>>) attributes {dimension_semantics = [#tpu.dimension_semantics<parallel>, #tpu.dimension_semantics<arbitrary>, #tpu.dimension_semantics<arbitrary>], iteration_bounds = array<i64: 2, 3, 1>, scalar_prefetch = 0 : i64, scratch_operands = 1 : i64, tpu.core_type = #tpu.core_type<tc>, window_params = [{transform_indices = @transform_0, window_bounds = array<i64: 1, 128, 256>}, {transform_indices = @transform_1, window_bounds = array<i64: 1, 256, 128>}, {transform_indices = @transform_2, window_bounds = array<i64: 128, 128>}, {pipeline_mode = #tpu.pipeline_mode<synchronous>, transform_indices = @transform_3, window_bounds = array<i64: 1, 128>}, {transform_indices = @transform_4, window_bounds = array<i64: 128, 128>}]} {
    %c0_i32 = arith.constant 0 : i32
    %0 = arith.cmpi eq, %arg1, %c0_i32 : i32
    %c0_i32_0 = arith.constant 0 : i32
    %1 = arith.cmpi eq, %arg2, %c0_i32_0 : i32
    %2 = arith.andi %0, %1 : i1
    %3 = arith.extui %2 : i1 to i32
    %c0_i32_1 = arith.constant 0 : i32
    %4 = arith.cmpi ne, %3, %c0_i32_1 : i32
    scf.if %4 {
      %cst_13 = arith.constant 0.000000e+00 : f32
      %18 = vector.broadcast %cst_13 : f32 to vector<128x128xf32>
      %c0_14 = arith.constant 0 : index
      %c0_15 = arith.constant 0 : index
      %19 = vector.load %arg8[%c0_14, %c0_15] : memref<128x128xf32, #tpu.memory_space<vmem>>, vector<128x128xf32>
      tpu.vector_store %arg8[%c0_14, %c0_15], %18 {strides = array<i32>} : memref<128x128xf32, #tpu.memory_space<vmem>>, vector<128x128xf32>,
    } else {
    }
    %c0 = arith.constant 0 : index
    %c0_2 = arith.constant 0 : index
    %5 = vector.load %arg8[%c0, %c0_2] : memref<128x128xf32, #tpu.memory_space<vmem>>, vector<128x128xf32>
    %c0_3 = arith.constant 0 : index
    %c0_4 = arith.constant 0 : index
    %c0_5 = arith.constant 0 : index
    %6 = vector.load %arg3[%c0_3, %c0_4, %c0_5] : memref<1x128x256xbf16, #tpu.memory_space<vmem>>, vector<1x128x256xbf16>
    %7 = vector.shape_cast %6 : vector<1x128x256xbf16> to vector<128x256xbf16>
    %c0_6 = arith.constant 0 : index
    %c0_7 = arith.constant 0 : index
    %c0_8 = arith.constant 0 : index
    %8 = vector.load %arg4[%c0_6, %c0_7, %c0_8] : memref<1x256x128xbf16, #tpu.memory_space<vmem>>, vector<1x256x128xbf16>
    %9 = vector.shape_cast %8 : vector<1x256x128xbf16> to vector<256x128xbf16>
    %cst = arith.constant dense<0.000000e+00> : vector<128x128xf32>
    %10 = tpu.matmul %7, %9, %cst {dimension_numbers = #tpu.dot_dimension_numbers<[1], [0], [0], [1], [0, 0, 1, 1], [], []>} : vector<128x256xbf16>, vector<256x128xbf16>, vector<128x128xf32> -> vector<128x128xf32>
    %11 = arith.addf %5, %10 : vector<128x128xf32>
    %c0_9 = arith.constant 0 : index
    %c0_10 = arith.constant 0 : index
    %12 = vector.load %arg8[%c0_9, %c0_10] : memref<128x128xf32, #tpu.memory_space<vmem>>, vector<128x128xf32>
    tpu.vector_store %arg8[%c0_9, %c0_10], %11 {strides = array<i32>} : memref<128x128xf32, #tpu.memory_space<vmem>>, vector<128x128xf32>,
    %c2_i32 = arith.constant 2 : i32
    %13 = arith.cmpi eq, %arg1, %c2_i32 : i32
    %c0_i32_11 = arith.constant 0 : i32
    %14 = arith.cmpi eq, %arg2, %c0_i32_11 : i32
    %15 = arith.andi %13, %14 : i1
    %16 = arith.extui %15 : i1 to i32
    %c0_i32_12 = arith.constant 0 : i32
    %17 = arith.cmpi ne, %16, %c0_i32_12 : i32
    scf.if %17 {
      %c0_13 = arith.constant 0 : index
      %c0_14 = arith.constant 0 : index
      %18 = vector.load %arg8[%c0_13, %c0_14] : memref<128x128xf32, #tpu.memory_space<vmem>>, vector<128x128xf32>
      %c0_15 = arith.constant 0 : index
      %c0_16 = arith.constant 0 : index
      %19 = vector.load %arg5[%c0_15, %c0_16] : memref<128x128xbf16, #tpu.memory_space<vmem>>, vector<128x128xbf16>
      %20 = arith.extf %19 : vector<128x128xbf16> to vector<128x128xf32>
      %21 = arith.addf %18, %20 : vector<128x128xf32>
      %c0_17 = arith.constant 0 : index
      %c0_18 = arith.constant 0 : index
      %22 = vector.load %arg6[%c0_17, %c0_18] : memref<1x128xf32, #tpu.memory_space<vmem>>, vector<1x128xf32>
      %23 = vector.broadcast %22 : vector<1x128xf32> to vector<128x128xf32>
      %24 = arith.addf %21, %23 : vector<128x128xf32>
      %cst_19 = arith.constant 0.000000e+00 : f32
      %25 = vector.broadcast %cst_19 : f32 to vector<128x128xf32>
      %26 = arith.cmpf oge, %24, %25 : vector<128x128xf32>
      %cst_20 = arith.constant 0.00999999977 : f32
      %27 = vector.broadcast %cst_20 : f32 to vector<128x128xf32>
      %28 = arith.mulf %27, %24 : vector<128x128xf32>
      %29 = arith.select %26, %24, %28 : vector<128x128xi1>, vector<128x128xf32>
      %30 = arith.truncf %29 : vector<128x128xf32> to vector<128x128xbf16>
      %c0_21 = arith.constant 0 : index
      %c0_22 = arith.constant 0 : index
      %31 = vector.load %arg7[%c0_21, %c0_22] : memref<128x128xbf16, #tpu.memory_space<vmem>>, vector<128x128xbf16>
      tpu.vector_store %arg7[%c0_21, %c0_22], %30 {strides = array<i32>} : memref<128x128xbf16, #tpu.memory_space<vmem>>, vector<128x128xbf16>,
    } else {
    }
    return
  }
  func.func @transform_0(%arg0: i32, %arg1: i32, %arg2: i32) -> (i32, i32, i32) {
    %c0_i32 = arith.constant 0 : i32
    return %arg1, %arg0, %arg2 : i32, i32, i32
  }
  func.func @transform_1(%arg0: i32, %arg1: i32, %arg2: i32) -> (i32, i32, i32) {
    %c0_i32 = arith.constant 0 : i32
    %c0_i32_0 = arith.constant 0 : i32
    return %arg1, %arg2, %c0_i32 : i32, i32, i32
  }
  func.func @transform_2(%arg0: i32, %arg1: i32, %arg2: i32) -> (i32, i32) {
    %c0_i32 = arith.constant 0 : i32
    %c0_i32_0 = arith.constant 0 : i32
    return %arg0, %c0_i32 : i32, i32
  }
  func.func @transform_3(%arg0: i32, %arg1: i32, %arg2: i32) -> (i32, i32) {
    %c0_i32 = arith.constant 0 : i32
    %c0_i32_0 = arith.constant 0 : i32
    %c0_i32_1 = arith.constant 0 : i32
    return %c0_i32, %c0_i32_0 : i32, i32
  }
  func.func @transform_4(%arg0: i32, %arg1: i32, %arg2: i32) -> (i32, i32) {
    %c0_i32 = arith.constant 0 : i32
    %c0_i32_0 = arith.constant 0 : i32
    return %arg0, %c0_i32 : i32, i32
  }
}

module attributes {stable_mosaic.version = 11 : i64} {
  func.func @_rgcn_propagate_kernel(%arg0: i32, %arg1: i32, %arg2: i32, %arg3: memref<1x128x256xbf16, #tpu.memory_space<vmem>>, %arg4: memref<1x256x128xbf16, #tpu.memory_space<vmem>>, %arg5: memref<128x128xbf16, #tpu.memory_space<vmem>>, %arg6: memref<1x128xf32, #tpu.memory_space<vmem>>, %arg7: memref<128x128xf32, #tpu.memory_space<vmem>>, %arg8: memref<128x128xf32, #tpu.memory_space<vmem>>) attributes {dimension_semantics = [#tpu.dimension_semantics<parallel>, #tpu.dimension_semantics<arbitrary>, #tpu.dimension_semantics<arbitrary>], iteration_bounds = array<i64: 2, 3, 1>, scalar_prefetch = 0 : i64, scratch_operands = 1 : i64, tpu.core_type = #tpu.core_type<tc>, window_params = [{transform_indices = @transform_0, window_bounds = array<i64: 1, 128, 256>}, {transform_indices = @transform_1, window_bounds = array<i64: 1, 256, 128>}, {transform_indices = @transform_2, window_bounds = array<i64: 128, 128>}, {pipeline_mode = #tpu.pipeline_mode<synchronous>, transform_indices = @transform_3, window_bounds = array<i64: 1, 128>}, {transform_indices = @transform_4, window_bounds = array<i64: 128, 128>}]} {
    %c0_i32 = arith.constant 0 : i32
    %0 = arith.cmpi eq, %arg1, %c0_i32 : i32
    %c0_i32_0 = arith.constant 0 : i32
    %1 = arith.cmpi eq, %arg2, %c0_i32_0 : i32
    %2 = arith.andi %0, %1 : i1
    %3 = arith.extui %2 : i1 to i32
    %c0_i32_1 = arith.constant 0 : i32
    %4 = arith.cmpi ne, %3, %c0_i32_1 : i32
    scf.if %4 {
      %cst_13 = arith.constant 0.000000e+00 : f32
      %18 = vector.broadcast %cst_13 : f32 to vector<128x128xf32>
      %c0_14 = arith.constant 0 : index
      %c0_15 = arith.constant 0 : index
      %19 = vector.load %arg8[%c0_14, %c0_15] : memref<128x128xf32, #tpu.memory_space<vmem>>, vector<128x128xf32>
      tpu.vector_store %arg8[%c0_14, %c0_15], %18 {strides = array<i32>} : memref<128x128xf32, #tpu.memory_space<vmem>>, vector<128x128xf32>,
    } else {
    }
    %c0 = arith.constant 0 : index
    %c0_2 = arith.constant 0 : index
    %5 = vector.load %arg8[%c0, %c0_2] : memref<128x128xf32, #tpu.memory_space<vmem>>, vector<128x128xf32>
    %c0_3 = arith.constant 0 : index
    %c0_4 = arith.constant 0 : index
    %c0_5 = arith.constant 0 : index
    %6 = vector.load %arg3[%c0_3, %c0_4, %c0_5] : memref<1x128x256xbf16, #tpu.memory_space<vmem>>, vector<1x128x256xbf16>
    %7 = vector.shape_cast %6 : vector<1x128x256xbf16> to vector<128x256xbf16>
    %c0_6 = arith.constant 0 : index
    %c0_7 = arith.constant 0 : index
    %c0_8 = arith.constant 0 : index
    %8 = vector.load %arg4[%c0_6, %c0_7, %c0_8] : memref<1x256x128xbf16, #tpu.memory_space<vmem>>, vector<1x256x128xbf16>
    %9 = vector.shape_cast %8 : vector<1x256x128xbf16> to vector<256x128xbf16>
    %cst = arith.constant dense<0.000000e+00> : vector<128x128xf32>
    %10 = tpu.matmul %7, %9, %cst {dimension_numbers = #tpu.dot_dimension_numbers<[1], [0], [0], [1], [0, 0, 1, 1], [], []>} : vector<128x256xbf16>, vector<256x128xbf16>, vector<128x128xf32> -> vector<128x128xf32>
    %11 = arith.addf %5, %10 : vector<128x128xf32>
    %c0_9 = arith.constant 0 : index
    %c0_10 = arith.constant 0 : index
    %12 = vector.load %arg8[%c0_9, %c0_10] : memref<128x128xf32, #tpu.memory_space<vmem>>, vector<128x128xf32>
    tpu.vector_store %arg8[%c0_9, %c0_10], %11 {strides = array<i32>} : memref<128x128xf32, #tpu.memory_space<vmem>>, vector<128x128xf32>,
    %c2_i32 = arith.constant 2 : i32
    %13 = arith.cmpi eq, %arg1, %c2_i32 : i32
    %c0_i32_11 = arith.constant 0 : i32
    %14 = arith.cmpi eq, %arg2, %c0_i32_11 : i32
    %15 = arith.andi %13, %14 : i1
    %16 = arith.extui %15 : i1 to i32
    %c0_i32_12 = arith.constant 0 : i32
    %17 = arith.cmpi ne, %16, %c0_i32_12 : i32
    scf.if %17 {
      %c0_13 = arith.constant 0 : index
      %c0_14 = arith.constant 0 : index
      %18 = vector.load %arg8[%c0_13, %c0_14] : memref<128x128xf32, #tpu.memory_space<vmem>>, vector<128x128xf32>
      %c0_15 = arith.constant 0 : index
      %c0_16 = arith.constant 0 : index
      %19 = vector.load %arg5[%c0_15, %c0_16] : memref<128x128xbf16, #tpu.memory_space<vmem>>, vector<128x128xbf16>
      %20 = arith.extf %19 : vector<128x128xbf16> to vector<128x128xf32>
      %21 = arith.addf %18, %20 : vector<128x128xf32>
      %c0_17 = arith.constant 0 : index
      %c0_18 = arith.constant 0 : index
      %22 = vector.load %arg6[%c0_17, %c0_18] : memref<1x128xf32, #tpu.memory_space<vmem>>, vector<1x128xf32>
      %23 = vector.broadcast %22 : vector<1x128xf32> to vector<128x128xf32>
      %24 = arith.addf %21, %23 : vector<128x128xf32>
      %c0_19 = arith.constant 0 : index
      %c0_20 = arith.constant 0 : index
      %25 = vector.load %arg7[%c0_19, %c0_20] : memref<128x128xf32, #tpu.memory_space<vmem>>, vector<128x128xf32>
      tpu.vector_store %arg7[%c0_19, %c0_20], %24 {strides = array<i32>} : memref<128x128xf32, #tpu.memory_space<vmem>>, vector<128x128xf32>,
    } else {
    }
    return
  }
  func.func @transform_0(%arg0: i32, %arg1: i32, %arg2: i32) -> (i32, i32, i32) {
    %c0_i32 = arith.constant 0 : i32
    return %arg1, %arg0, %arg2 : i32, i32, i32
  }
  func.func @transform_1(%arg0: i32, %arg1: i32, %arg2: i32) -> (i32, i32, i32) {
    %c0_i32 = arith.constant 0 : i32
    %c0_i32_0 = arith.constant 0 : i32
    return %arg1, %arg2, %c0_i32 : i32, i32, i32
  }
  func.func @transform_2(%arg0: i32, %arg1: i32, %arg2: i32) -> (i32, i32) {
    %c0_i32 = arith.constant 0 : i32
    %c0_i32_0 = arith.constant 0 : i32
    return %arg0, %c0_i32 : i32, i32
  }
  func.func @transform_3(%arg0: i32, %arg1: i32, %arg2: i32) -> (i32, i32) {
    %c0_i32 = arith.constant 0 : i32
    %c0_i32_0 = arith.constant 0 : i32
    %c0_i32_1 = arith.constant 0 : i32
    return %c0_i32, %c0_i32_0 : i32, i32
  }
  func.func @transform_4(%arg0: i32, %arg1: i32, %arg2: i32) -> (i32, i32) {
    %c0_i32 = arith.constant 0 : i32
    %c0_i32_0 = arith.constant 0 : i32
    return %arg0, %c0_i32 : i32, i32
  }
}

</mosaic_0001>

<llo_original>
// kernel: rgcn_forward.4
$region0: #{rgcn_forward.4}
  #allocation0 [shape = 'u32[]', space=smem, size = 0x4, offset = 0x4, fixed_abs, tag = 'smem constant byte address 0x4 - core index']
  #allocation1 [shape = 'u32[144,128]{1,0:T(1,128)}', space=vmem, size = 0x12000, scoped, tag = 'internal scratch']
  %s0 = inlined_call_operand.vmem [shape: bf16[256,128], index: 0, kind: input, shape index: {}]
  %s1 = inlined_call_operand.vmem [shape: bf16[4,128,128], index: 1, kind: input, shape index: {}]
  %s2 = inlined_call_operand.vmem [shape: bf16[4,256,128], index: 2, kind: output, shape index: {}]
  %s3 = sld [smem:[#allocation0]]
  $region41: #{rgcn_forward.4} parent=0
    _
  %s5 = ssub.s32 1, %s3
  %s6 = scalar_select 0, %s5, %s3
  loop: start=0, step=1, limit=10
  $region2: #{rgcn_forward.4} parent=0 // loop_pre_header
    _
  $region3: #{rgcn_forward.4} parent=0 // loop_header
    %s8 = sphi 0, %s12
    %p9 = scmp.ge.s32.totalorder %s8, 10
    %s15 = sphi 0, %s27
    %s16 = sphi 0, %s23
    %s17 = sphi 0, %s15
    %s18 = sphi 0, %s16
    %s19 = sphi 0, %s17
    %s20 = sphi 0, %s18
    %s30 = sphi 0, %s32
    %s33 = sphi 0, %s30
    %s34 = sphi 0, %s33
    %s50 = sphi 0, %s34
    %s56 = sphi 0, %s58
    %s59 = sphi 0, %s56
    %s60 = sphi 0, %s59
    %s76 = sphi 0, %s60
    %s84 = sphi 0, %s86
    %s87 = sphi 0, %s84
    %s88 = sphi 0, %s87
    %s104 = sphi 0, %s88
  $region4: #{rgcn_forward.4} parent=0 // loop_header_branch
    %11 = sbr.rel (%p9) target = $region8
  $region5: #{rgcn_forward.4} parent=0 // loop_body
    %s13 = ssub.s32 %s8, 1
    %s14 = ssub.s32 %s8, 2
    %s21 = sadd.s32 1, %s16
    %p22 = scmp.ge.s32.totalorder %s21, 2
    %s23 = scalar_select %p22, 0, %s21
    %s24 = sadd.s32 1, %s15
    %s25 = scalar_select %p22, %s24, %s15
    %p26 = scmp.ge.s32.totalorder %s25, 4
    %s27 = scalar_select %p26, 0, %s25
    %s28 = ssub.s32 %s16, %s23
    %p29 = scmp.eq.s32.totalorder %s28, 0
    %s31 = sadd.s32 %s30, 1
    %s32 = scalar_select %p29, %s30, %s31
    %p35 = pneg %p29
    %p36 = scmp.eq.s32.totalorder %s8, 7
    %p37 = por %p35, %p36
    %p38 = scmp.ne.s32.totalorder %s30, %s33
    %p39 = scmp.eq.s32.totalorder %s8, 0
    %p40 = por %p38, %p39
    %p41 = scmp.ne.s32.totalorder %s30, %s33
    %p42 = scmp.eq.s32.totalorder %s13, 7
    %p43 = por %p41, %p42
    %p44 = scmp.ne.s32.totalorder %s33, %s34
    %p45 = scmp.eq.s32.totalorder %s13, 0
    %p46 = por %p44, %p45
    %p47 = scmp.ne.s32.totalorder %s33, %s34
    %p48 = scmp.eq.s32.totalorder %s14, 7
    %p49 = por %p47, %p48
    %p51 = scmp.ne.s32.totalorder %s34, %s50
    %p52 = scmp.eq.s32.totalorder %s14, 0
    %p53 = por %p51, %p52
    %s54 = ssub.s32 %s15, %s27
    %p55 = scmp.eq.s32.totalorder %s54, 0
    %s57 = sadd.s32 %s56, 1
    %s58 = scalar_select %p55, %s56, %s57
    %p61 = pneg %p55
    %p62 = scmp.eq.s32.totalorder %s8, 7
    %p63 = por %p61, %p62
    %p64 = scmp.ne.s32.totalorder %s56, %s59
    %p65 = scmp.eq.s32.totalorder %s8, 0
    %p66 = por %p64, %p65
    %p67 = scmp.ne.s32.totalorder %s56, %s59
    %p68 = scmp.eq.s32.totalorder %s13, 7
    %p69 = por %p67, %p68
    %p70 = scmp.ne.s32.totalorder %s59, %s60
    %p71 = scmp.eq.s32.totalorder %s13, 0
    %p72 = por %p70, %p71
    %p73 = scmp.ne.s32.totalorder %s59, %s60
    %p74 = scmp.eq.s32.totalorder %s14, 7
    %p75 = por %p73, %p74
    %p77 = scmp.ne.s32.totalorder %s60, %s76
    %p78 = scmp.eq.s32.totalorder %s14, 0
    %p79 = por %p77, %p78
    %s80 = ssub.s32 %s15, %s27
    %s81 = ssub.s32 %s16, %s23
    %s82 = sor.u32 %s80, %s81
    %p83 = scmp.eq.s32.totalorder %s82, 0
    %s85 = sadd.s32 %s84, 1
    %s86 = scalar_select %p83, %s84, %s85
    %p89 = pneg %p83
    %p90 = scmp.eq.s32.totalorder %s8, 7
    %p91 = por %p89, %p90
    %p92 = scmp.ne.s32.totalorder %s84, %s87
    %p93 = scmp.eq.s32.totalorder %s8, 0
    %p94 = por %p92, %p93
    %p95 = scmp.ne.s32.totalorder %s84, %s87
    %p96 = scmp.eq.s32.totalorder %s13, 7
    %p97 = por %p95, %p96
    %p98 = scmp.ne.s32.totalorder %s87, %s88
    %p99 = scmp.eq.s32.totalorder %s13, 0
    %p100 = por %p98, %p99
    %p101 = scmp.ne.s32.totalorder %s87, %s88
    %p102 = scmp.eq.s32.totalorder %s14, 7
    %p103 = por %p101, %p102
    %p105 = scmp.ne.s32.totalorder %s88, %s104
    %p106 = scmp.eq.s32.totalorder %s14, 0
    %p107 = por %p105, %p106
    %p108 = scmp.le.s32.totalorder 1, %s8
    %p109 = scmp.lt.s32.totalorder %s8, 9
    %p110 = pnand %p108, %p109
    %p111 = pneg %p110
    // Predicated region
    $region9: #{rgcn_forward.4} parent=5 // pred_check
      _
    $region10: #{rgcn_forward.4} parent=5 // pred_check_branch
      %113 = sbr.rel (%p110) target = $region12
    $region11: #{rgcn_forward.4} parent=5 // pred_region
      %s114 = ssub.s32 %s8, 1
    $region12: #{rgcn_forward.4} parent=5 // pred_fallthru
      _
    %p115 = scmp.lt.s32.totalorder %s8, 8
    // Predicated region
    $region13: #{rgcn_forward.4} parent=5 // pred_check
      %p116 = pneg %p115
    $region14: #{rgcn_forward.4} parent=5 // pred_check_branch
      %118 = sbr.rel (%p116) target = $region16
    $region15: #{rgcn_forward.4} parent=5 // pred_region
      // Predicated region
      $region17: #{rgcn_forward.4} parent=15 // pred_check
        %p119 = pneg %p40
      $region18: #{rgcn_forward.4} parent=15 // pred_check_branch
        %121 = sbr.rel (%p119) target = $region20
      $region19: #{rgcn_forward.4} parent=15 // pred_region
        %s122 = smul.u32 16, %s16
        %p123 = scmp.lt.s32.totalorder %s122, 31
        %s124 = scalar_select %p123, %s122, 31
        %s125 = smul.addr %s124, 4
        %s126 = scalar_lea.vmem %s0, %s125
        %s127 = smul.u32 16, %s16
      $region20: #{rgcn_forward.4} parent=15 // pred_fallthru
        _
      // Predicated region
      $region21: #{rgcn_forward.4} parent=15 // pred_check
        %p128 = pneg %p66
      $region22: #{rgcn_forward.4} parent=15 // pred_check_branch
        %130 = sbr.rel (%p128) target = $region24
      $region23: #{rgcn_forward.4} parent=15 // pred_region
        %p131 = scmp.lt.s32.totalorder %s15, 3
        %s132 = scalar_select %p131, %s15, 3
        %s133 = smul.addr %s132, 16
        %s134 = smul.addr %s133, 4
        %s135 = scalar_lea.vmem %s1, %s134
      $region24: #{rgcn_forward.4} parent=15 // pred_fallthru
        _
    $region16: #{rgcn_forward.4} parent=5 // pred_fallthru
      _
    %p136 = scmp.le.s32.totalorder 1, %s8
    %p137 = scmp.lt.s32.totalorder %s8, 9
    %p138 = pnand %p136, %p137
    %p139 = pneg %p138
    // Predicated region
    $region25: #{rgcn_forward.4} parent=5 // pred_check
      _
    $region26: #{rgcn_forward.4} parent=5 // pred_check_branch
      %141 = sbr.rel (%p138) target = $region28
    $region27: #{rgcn_forward.4} parent=5 // pred_region
      %s142 = ssub.s32 %s8, 1
      %s143 = smul.u32 16, %s18
      %p144 = scmp.lt.s32.totalorder %s143, 31
      %s145 = scalar_select %p144, %s143, 31
      %s146 = smul.addr %s145, 4
      %s147 = scalar_lea.vmem %s0, %s146
      %p148 = pneg %p46
      %p149 = pneg %p43
      %p150 = scmp.lt.s32.totalorder %s17, 3
      %s151 = scalar_select %p150, %s17, 3
      %s152 = smul.addr %s151, 16
      %s153 = smul.addr %s152, 4
      %s154 = scalar_lea.vmem %s1, %s153
      %p155 = pneg %p72
      %p156 = pneg %p69
      %p157 = pneg %p100
      %p158 = pneg %p97
      %s159 = smul.u32 16, %s18
      %p160 = scmp.lt.s32.totalorder %s17, 3
      %s161 = scalar_select %p160, %s17, 3
      %p162 = scmp.lt.s32.totalorder %s159, 31
      %s163 = scalar_select %p162, %s159, 31
      %s164 = smul.addr %s161, 32
      %s165 = sadd.s32 %s163, %s164
      %s166 = smul.addr %s165, 4
      %s167 = scalar_lea.vmem %s2, %s166
      %s168 = smul.u32 16, %s18
      %p169 = scmp.lt.s32.totalorder %s168, 31
      %s170 = scalar_select %p169, %s168, 31
      %s171 = smul.addr %s170, 4
      %s172 = scalar_lea.vmem %s0, %s171
      %s173 = smul.u32 16, %s18
      %p174 = scmp.lt.s32.totalorder %s17, 3
      %s175 = scalar_select %p174, %s17, 3
      %s176 = smul.addr %s175, 16
      %s177 = smul.addr %s176, 4
      %s178 = scalar_lea.vmem %s1, %s177
      %s179 = smul.u32 16, %s18
      %p180 = scmp.lt.s32.totalorder %s17, 3
      %s181 = scalar_select %p180, %s17, 3
      %p182 = scmp.lt.s32.totalorder %s179, 31
      %s183 = scalar_select %p182, %s179, 31
      %s184 = smul.addr %s181, 32
      %s185 = sadd.s32 %s183, %s184
      %s186 = smul.addr %s185, 4
      %s187 = scalar_lea.vmem %s2, %s186
      %s188 = smul.u32 16, %s18
      %v190 = vld [vmem:[%s172] sm:$0xf]
      %v191 = vld [vmem:[%s172 + $0x4] sm:$0xf]
      %v192 = vld [vmem:[%s172 + $0x8] sm:$0xf]
      %v193 = vld [vmem:[%s172 + $0xc] sm:$0xf]
      %v194 = vld [vmem:[%s172 + $0x10] sm:$0xf]
      %v195 = vld [vmem:[%s172 + $0x14] sm:$0xf]
      %v196 = vld [vmem:[%s172 + $0x18] sm:$0xf]
      %v197 = vld [vmem:[%s172 + $0x1c] sm:$0xf]
      %v198 = vld [vmem:[%s172 + $0x20] sm:$0xf]
      %v199 = vld [vmem:[%s172 + $0x24] sm:$0xf]
      %v200 = vld [vmem:[%s172 + $0x28] sm:$0xf]
      %v201 = vld [vmem:[%s172 + $0x2c] sm:$0xf]
      %v202 = vld [vmem:[%s172 + $0x30] sm:$0xf]
      %v203 = vld [vmem:[%s172 + $0x34] sm:$0xf]
      %v204 = vld [vmem:[%s172 + $0x38] sm:$0xf]
      %v205 = vld [vmem:[%s172 + $0x3c] sm:$0xf]
      %v206 = vld [vmem:[%s178] sm:$0xf]
      %v207 = vld [vmem:[%s178 + $0x4] sm:$0xf]
      %v208 = vld [vmem:[%s178 + $0x8] sm:$0xf]
      %v209 = vld [vmem:[%s178 + $0xc] sm:$0xf]
      %v210 = vld [vmem:[%s178 + $0x10] sm:$0xf]
      %v211 = vld [vmem:[%s178 + $0x14] sm:$0xf]
      %v212 = vld [vmem:[%s178 + $0x18] sm:$0xf]
      %v213 = vld [vmem:[%s178 + $0x1c] sm:$0xf]
      %v214 = vld [vmem:[%s178 + $0x20] sm:$0xf]
      %v215 = vld [vmem:[%s178 + $0x24] sm:$0xf]
      %v216 = vld [vmem:[%s178 + $0x28] sm:$0xf]
      %v217 = vld [vmem:[%s178 + $0x2c] sm:$0xf]
      %v218 = vld [vmem:[%s178 + $0x30] sm:$0xf]
      %v219 = vld [vmem:[%s178 + $0x34] sm:$0xf]
      %v220 = vld [vmem:[%s178 + $0x38] sm:$0xf]
      %v221 = vld [vmem:[%s178 + $0x3c] sm:$0xf]
      %v238 = vunpack.c.l.b16 %v190
      %v239 = vunpack.c.l.b16 %v191
      %v240 = vunpack.c.l.b16 %v192
      %v241 = vunpack.c.l.b16 %v193
      %v242 = vunpack.c.l.b16 %v194
      %v243 = vunpack.c.l.b16 %v195
      %v244 = vunpack.c.l.b16 %v196
      %v245 = vunpack.c.l.b16 %v197
      %v246 = vunpack.c.l.b16 %v198
      %v247 = vunpack.c.l.b16 %v199
      %v248 = vunpack.c.l.b16 %v200
      %v249 = vunpack.c.l.b16 %v201
      %v250 = vunpack.c.l.b16 %v202
      %v251 = vunpack.c.l.b16 %v203
      %v252 = vunpack.c.l.b16 %v204
      %v253 = vunpack.c.l.b16 %v205
      %v254 = vpack.c.b16 %v239, %v238
      %v255 = vpack.c.b16 %v241, %v240
      %v256 = vpack.c.b16 %v243, %v242
      %v257 = vpack.c.b16 %v245, %v244
      %v258 = vpack.c.b16 %v247, %v246
      %v259 = vpack.c.b16 %v249, %v248
      %v260 = vpack.c.b16 %v251, %v250
      %v261 = vpack.c.b16 %v253, %v252
      %v286 = vunpack.c.l.b16 %v206
      %v287 = vunpack.c.l.b16 %v207
      %v288 = vunpack.c.l.b16 %v208
      %v289 = vunpack.c.l.b16 %v209
      %v290 = vunpack.c.l.b16 %v210
      %v291 = vunpack.c.l.b16 %v211
      %v292 = vunpack.c.l.b16 %v212
      %v293 = vunpack.c.l.b16 %v213
      %v294 = vunpack.c.l.b16 %v214
      %v295 = vunpack.c.l.b16 %v215
      %v296 = vunpack.c.l.b16 %v216
      %v297 = vunpack.c.l.b16 %v217
      %v298 = vunpack.c.l.b16 %v218
      %v299 = vunpack.c.l.b16 %v219
      %v300 = vunpack.c.l.b16 %v220
      %v301 = vunpack.c.l.b16 %v221
      %v302 = vpack.c.b16 %v287, %v286
      %v303 = vpack.c.b16 %v289, %v288
      %v304 = vpack.c.b16 %v291, %v290
      %v305 = vpack.c.b16 %v293, %v292
      %v306 = vpack.c.b16 %v295, %v294
      %v307 = vpack.c.b16 %v297, %v296
      %v308 = vpack.c.b16 %v299, %v298
      %v309 = vpack.c.b16 %v301, %v300
      %318 = vmatprep.subr.bf16.mxu0 0
      %319 = vmatpush1.bf16.msra.mxu0 %v302
      %320 = vmatprep.subr.bf16.mxu0 0
      %321 = vmatpush1.bf16.msra.mxu0 %v303
      %322 = vmatprep.subr.bf16.mxu0 0
      %323 = vmatpush1.bf16.msra.mxu0 %v304
      %324 = vmatprep.subr.bf16.mxu0 0
      %325 = vmatpush1.bf16.msra.mxu0 %v305
      %326 = vmatprep.subr.bf16.mxu0 0
      %327 = vmatpush1.bf16.msra.mxu0 %v306
      %328 = vmatprep.subr.bf16.mxu0 0
      %329 = vmatpush1.bf16.msra.mxu0 %v307
      %330 = vmatprep.subr.bf16.mxu0 0
      %331 = vmatpush1.bf16.msra.mxu0 %v308
      %332 = vmatprep.subr.bf16.mxu0 0
      %333 = vmatpush1.bf16.msra.mxu0 %v309
      %334 = vmatprep.subr.bf16.mxu0 0
      %335 = vmatpush1.bf16.msra.mxu0 0
      %336 = vmatprep.subr.bf16.mxu0 0
      %337 = vmatpush1.bf16.msra.mxu0 0
      %338 = vmatprep.subr.bf16.mxu0 0
      %339 = vmatpush1.bf16.msra.mxu0 0
      %340 = vmatprep.subr.bf16.mxu0 0
      %341 = vmatpush1.bf16.msra.mxu0 0
      %342 = vmatprep.subr.bf16.mxu0 0
      %343 = vmatpush1.bf16.msra.mxu0 0
      %344 = vmatprep.subr.bf16.mxu0 0
      %345 = vmatpush1.bf16.msra.mxu0 0
      %346 = vmatprep.subr.bf16.mxu0 0
      %347 = vmatpush1.bf16.msra.mxu0 0
      %348 = vmatprep.subr.bf16.mxu0 0
      %349 = vmatpush1.bf16.msra.mxu0 0
      %350 = vmatprep.mubr.bf16.mxu0 0
      %351 = vmatmul.mubr.bf16.gmra.mrb[0].mxu0 %v254
      %v352 = vpop.f32.mrb[0].mxu0
      %v353 = vadd.f32 0.0, %v352
      %v354 = vpop.f32.mrb[0].mxu0
      %v355 = vpop.f32.mrb[0].mxu0
      %v356 = vadd.f32 0.0, %v355
      %v357 = vpop.f32.mrb[0].mxu0
      %358 = vmatprep.mubr.bf16.mxu0 0
      %359 = vmatmul.mubr.bf16.gmra.mrb[0].mxu0 %v255
      %v360 = vpop.f32.mrb[0].mxu0
      %v361 = vadd.f32 0.0, %v360
      %v362 = vpop.f32.mrb[0].mxu0
      %v363 = vpop.f32.mrb[0].mxu0
      %v364 = vadd.f32 0.0, %v363
      %v365 = vpop.f32.mrb[0].mxu0
      %366 = vmatprep.mubr.bf16.mxu0 0
      %367 = vmatmul.mubr.bf16.gmra.mrb[0].mxu0 %v256
      %v368 = vpop.f32.mrb[0].mxu0
      %v369 = vadd.f32 0.0, %v368
      %v370 = vpop.f32.mrb[0].mxu0
      %v371 = vpop.f32.mrb[0].mxu0
      %v372 = vadd.f32 0.0, %v371
      %v373 = vpop.f32.mrb[0].mxu0
      %374 = vmatprep.mubr.bf16.mxu0 0
      %375 = vmatmul.mubr.bf16.gmra.mrb[0].mxu0 %v257
      %v376 = vpop.f32.mrb[0].mxu0
      %v377 = vadd.f32 0.0, %v376
      %v378 = vpop.f32.mrb[0].mxu0
      %v379 = vpop.f32.mrb[0].mxu0
      %v380 = vadd.f32 0.0, %v379
      %v381 = vpop.f32.mrb[0].mxu0
      %382 = vmatprep.mubr.bf16.mxu0 0
      %383 = vmatmul.mubr.bf16.gmra.mrb[0].mxu0 %v258
      %v384 = vpop.f32.mrb[0].mxu0
      %v385 = vadd.f32 0.0, %v384
      %v386 = vpop.f32.mrb[0].mxu0
      %v387 = vpop.f32.mrb[0].mxu0
      %v388 = vadd.f32 0.0, %v387
      %v389 = vpop.f32.mrb[0].mxu0
      %390 = vmatprep.mubr.bf16.mxu0 0
      %391 = vmatmul.mubr.bf16.gmra.mrb[0].mxu0 %v259
      %v392 = vpop.f32.mrb[0].mxu0
      %v393 = vadd.f32 0.0, %v392
      %v394 = vpop.f32.mrb[0].mxu0
      %v395 = vpop.f32.mrb[0].mxu0
      %v396 = vadd.f32 0.0, %v395
      %v397 = vpop.f32.mrb[0].mxu0
      %398 = vmatprep.mubr.bf16.mxu0 0
      %399 = vmatmul.mubr.bf16.gmra.mrb[0].mxu0 %v260
      %v400 = vpop.f32.mrb[0].mxu0
      %v401 = vadd.f32 0.0, %v400
      %v402 = vpop.f32.mrb[0].mxu0
      %v403 = vpop.f32.mrb[0].mxu0
      %v404 = vadd.f32 0.0, %v403
      %v405 = vpop.f32.mrb[0].mxu0
      %406 = vmatprep.mubr.bf16.mxu0 0
      %407 = vmatmul.mubr.bf16.gmra.mrb[0].mxu0 %v261
      %v408 = vpop.f32.mrb[0].mxu0
      %v409 = vadd.f32 0.0, %v408
      %v410 = vpop.f32.mrb[0].mxu0
      %v411 = vpop.f32.mrb[0].mxu0
      %v412 = vadd.f32 0.0, %v411
      %v413 = vpop.f32.mrb[0].mxu0
      %414 = vdwg.mxu0
      %v415 = vpack.c.bf16 %v356, %v353
      %v416 = vpack.c.bf16 %v364, %v361
      %v417 = vpack.c.bf16 %v372, %v369
      %v418 = vpack.c.bf16 %v380, %v377
      %v419 = vpack.c.bf16 %v388, %v385
      %v420 = vpack.c.bf16 %v396, %v393
      %v421 = vpack.c.bf16 %v404, %v401
      %v422 = vpack.c.bf16 %v412, %v409
      %v431 = vunpack.c.l.b16 %v415
      %v432 = vunpack.c.h.b16 %v415
      %v433 = vunpack.c.l.b16 %v416
      %v434 = vunpack.c.h.b16 %v416
      %v435 = vunpack.c.l.b16 %v417
      %v436 = vunpack.c.h.b16 %v417
      %v437 = vunpack.c.l.b16 %v418
      %v438 = vunpack.c.h.b16 %v418
      %v439 = vunpack.c.l.b16 %v419
      %v440 = vunpack.c.h.b16 %v419
      %v441 = vunpack.c.l.b16 %v420
      %v442 = vunpack.c.h.b16 %v420
      %v443 = vunpack.c.l.b16 %v421
      %v444 = vunpack.c.h.b16 %v421
      %v445 = vunpack.c.l.b16 %v422
      %v446 = vunpack.c.h.b16 %v422
      %v447 = vpack.c.b16 %v431, %v431
      %v448 = vpack.c.b16 %v432, %v432
      %v449 = vpack.c.b16 %v433, %v433
      %v450 = vpack.c.b16 %v434, %v434
      %v451 = vpack.c.b16 %v435, %v435
      %v452 = vpack.c.b16 %v436, %v436
      %v453 = vpack.c.b16 %v437, %v437
      %v454 = vpack.c.b16 %v438, %v438
      %v455 = vpack.c.b16 %v439, %v439
      %v456 = vpack.c.b16 %v440, %v440
      %v457 = vpack.c.b16 %v441, %v441
      %v458 = vpack.c.b16 %v442, %v442
      %v459 = vpack.c.b16 %v443, %v443
      %v460 = vpack.c.b16 %v444, %v444
      %v461 = vpack.c.b16 %v445, %v445
      %v462 = vpack.c.b16 %v446, %v446
      %479 = vst [vmem:[%s187] sm:$0xf] %v447
      %480 = vst [vmem:[%s187 + $0x4] sm:$0xf] %v448
      %481 = vst [vmem:[%s187 + $0x8] sm:$0xf] %v449
      %482 = vst [vmem:[%s187 + $0xc] sm:$0xf] %v450
      %483 = vst [vmem:[%s187 + $0x10] sm:$0xf] %v451
      %484 = vst [vmem:[%s187 + $0x14] sm:$0xf] %v452
      %485 = vst [vmem:[%s187 + $0x18] sm:$0xf] %v453
      %486 = vst [vmem:[%s187 + $0x1c] sm:$0xf] %v454
      %487 = vst [vmem:[%s187 + $0x20] sm:$0xf] %v455
      %488 = vst [vmem:[%s187 + $0x24] sm:$0xf] %v456
      %489 = vst [vmem:[%s187 + $0x28] sm:$0xf] %v457
      %490 = vst [vmem:[%s187 + $0x2c] sm:$0xf] %v458
      %491 = vst [vmem:[%s187 + $0x30] sm:$0xf] %v459
      %492 = vst [vmem:[%s187 + $0x34] sm:$0xf] %v460
      %493 = vst [vmem:[%s187 + $0x38] sm:$0xf] %v461
      %494 = vst [vmem:[%s187 + $0x3c] sm:$0xf] %v462
      %s495 = smul.u32 16, %s18
      %p496 = scmp.lt.s32.totalorder %s17, 3
      %s497 = scalar_select %p496, %s17, 3
      %p498 = scmp.lt.s32.totalorder %s495, 31
      %s499 = scalar_select %p498, %s495, 31
      %s500 = smul.addr %s497, 32
      %s501 = sadd.s32 %s499, %s500
      %s502 = smul.addr %s501, 4
      %s503 = scalar_lea.vmem %s2, %s502
      // Predicated region
      $region29: #{rgcn_forward.4} parent=27 // pred_check
        %p504 = pneg %p97
      $region30: #{rgcn_forward.4} parent=27 // pred_check_branch
        %506 = sbr.rel (%p504) target = $region32
      $region31: #{rgcn_forward.4} parent=27 // pred_region
        %s507 = smul.u32 16, %s18
      $region32: #{rgcn_forward.4} parent=27 // pred_fallthru
        _
    $region28: #{rgcn_forward.4} parent=5 // pred_fallthru
      _
    %p508 = scmp.le.s32.totalorder 2, %s8
    // Predicated region
    $region33: #{rgcn_forward.4} parent=5 // pred_check
      %p509 = pneg %p508
    $region34: #{rgcn_forward.4} parent=5 // pred_check_branch
      %511 = sbr.rel (%p509) target = $region36
    $region35: #{rgcn_forward.4} parent=5 // pred_region
      %s512 = ssub.s32 %s8, 2
      // Predicated region
      $region37: #{rgcn_forward.4} parent=35 // pred_check
        %p513 = pneg %p103
      $region38: #{rgcn_forward.4} parent=35 // pred_check_branch
        %515 = sbr.rel (%p513) target = $region40
      $region39: #{rgcn_forward.4} parent=35 // pred_region
        %s516 = smul.u32 16, %s20
        %p517 = scmp.lt.s32.totalorder %s19, 3
        %s518 = scalar_select %p517, %s19, 3
        %p519 = scmp.lt.s32.totalorder %s516, 31
        %s520 = scalar_select %p519, %s516, 31
        %s521 = smul.addr %s518, 32
        %s522 = sadd.s32 %s520, %s521
        %s523 = smul.addr %s522, 4
        %s524 = scalar_lea.vmem %s2, %s523
      $region40: #{rgcn_forward.4} parent=35 // pred_fallthru
        _
    $region36: #{rgcn_forward.4} parent=5 // pred_fallthru
      _
  $region6: #{rgcn_forward.4} parent=0 // loop_footer
    %s12 = sadd.s32 1, %s8
  $region7: #{rgcn_forward.4} parent=0 // loop_footer_branch
    %7 = sbr.rel target = $region3
  $region8: #{rgcn_forward.4} parent=0 // loop_exit
    _

// kernel: rgcn_forward.3
$region0: #{rgcn_forward.3}
  #allocation0 [shape = 'u32[]', space=smem, size = 0x4, offset = 0x4, fixed_abs, tag = 'smem constant byte address 0x4 - core index']
  #allocation1 [shape = 'u32[144,128]{1,0:T(1,128)}', space=vmem, size = 0x12000, scoped, tag = 'internal scratch']
  #allocation2 [shape = 'f32[128,128]{1,0:T(8,128)}', space=vmem, size = 0x10000, scoped, tag = 'scratch operand']
  %s0 = inlined_call_operand.hbm [shape: bf16[3,256,256], index: 0, kind: input, shape index: {}]
  %s1 = inlined_call_operand.hbm [shape: bf16[3,256,128], index: 1, kind: input, shape index: {}]
  %s2 = inlined_call_operand.hbm [shape: bf16[256,128], index: 2, kind: input, shape index: {}]
  %s3 = inlined_call_operand.vmem [shape: f32[1,128], index: 3, kind: input, shape index: {}]
  %s4 = inlined_call_operand.vmem [shape: bf16[256,128], index: 4, kind: output, shape index: {}]
  %s5 = sld [smem:[#allocation0]]
  $region69: #{rgcn_forward.3} parent=0
    _
  %s7 = ssub.s32 1, %s5
  %s8 = scalar_select 0, %s7, %s5
  $region1: #{rgcn_forward.3} parent=0
    #allocation3 [shape = 'u8[131072]{0}', space=vmem, size = 0x20000, scoped, tag = 'input window, operand 0']
    #allocation4 [shape = 's32[2]{0}', space=sflag, size = 0x8, scoped, tag = 'scoped memory for rgcn_forward.3']
    #allocation5 [shape = 'u8[131072]{0}', space=vmem, size = 0x20000, scoped, tag = 'input window, operand 1']
    #allocation6 [shape = 's32[2]{0}', space=sflag, size = 0x8, scoped, tag = 'scoped memory for rgcn_forward.3']
    #allocation7 [shape = 'u8[65536]{0}', space=vmem, size = 0x10000, scoped, tag = 'input window, operand 2']
    %9 = vsyncpa [#allocation4], 0
    %s10 = scalar_lea.sflag [#allocation4], 1
    %11 = vsyncpa %s10, 0
    %12 = vsyncpa [#allocation6], 0
    %s13 = scalar_lea.sflag [#allocation6], 1
    %14 = vsyncpa %s13, 0
    loop: start=0, step=1, limit=8
    $region2: #{rgcn_forward.3} parent=1 // loop_pre_header
      _
    $region3: #{rgcn_forward.3} parent=1 // loop_header
      %s16 = sphi 0, %s20
      %p17 = scmp.ge.s32.totalorder %s16, 8
      %s23 = sphi 0, %s42
      %s24 = sphi 0, %s38
      %s25 = sphi 0, %s34
      %s26 = sphi 0, %s23
      %s27 = sphi 0, %s24
      %s28 = sphi 0, %s25
      %s29 = sphi 0, %s26
      %s30 = sphi 0, %s27
      %s31 = sphi 0, %s28
      %s49 = sphi 0, %s51
      %s52 = sphi 0, %s49
      %s53 = sphi 0, %s52
      %s69 = sphi 0, %s53
      %s77 = sphi 0, %s79
      %s80 = sphi 0, %s77
      %s81 = sphi 0, %s80
      %s97 = sphi 0, %s81
      %s103 = sphi 0, %s105
      %s106 = sphi 0, %s103
      %s107 = sphi 0, %s106
      %s123 = sphi 0, %s107
      %s127 = sphi 0, %s127
      %s129 = sphi 0, %s127
      %s130 = sphi 0, %s129
      %s144 = sphi 0, %s130
      %s150 = sphi 0, %s152
      %s153 = sphi 0, %s150
      %s154 = sphi 0, %s153
      %s170 = sphi 0, %s154
    $region4: #{rgcn_forward.3} parent=1 // loop_header_branch
      %19 = sbr.rel (%p17) target = $region8
    $region5: #{rgcn_forward.3} parent=1 // loop_body
      %s21 = ssub.s32 %s16, 1
      %s22 = ssub.s32 %s16, 2
      %s32 = sadd.s32 1, %s25
      %p33 = scmp.ge.s32.totalorder %s32, 1
      %s34 = scalar_select %p33, 0, %s32
      %s35 = sadd.s32 1, %s24
      %s36 = scalar_select %p33, %s35, %s24
      %p37 = scmp.ge.s32.totalorder %s36, 3
      %s38 = scalar_select %p37, 0, %s36
      %s39 = sadd.s32 1, %s23
      %s40 = scalar_select %p37, %s39, %s23
      %p41 = scmp.ge.s32.totalorder %s40, 2
      %s42 = scalar_select %p41, 0, %s40
      %s43 = ssub.s32 %s24, %s38
      %s44 = ssub.s32 %s23, %s42
      %s45 = sor.u32 %s43, %s44
      %s46 = ssub.s32 %s25, %s34
      %s47 = sor.u32 %s45, %s46
      %p48 = scmp.eq.s32.totalorder %s47, 0
      %s50 = sadd.s32 %s49, 1
      %s51 = scalar_select %p48, %s49, %s50
      %p54 = pneg %p48
      %p55 = scmp.eq.s32.totalorder %s16, 5
      %p56 = por %p54, %p55
      %p57 = scmp.ne.s32.totalorder %s49, %s52
      %p58 = scmp.eq.s32.totalorder %s16, 0
      %p59 = por %p57, %p58
      %p60 = scmp.ne.s32.totalorder %s49, %s52
      %p61 = scmp.eq.s32.totalorder %s21, 5
      %p62 = por %p60, %p61
      %p63 = scmp.ne.s32.totalorder %s52, %s53
      %p64 = scmp.eq.s32.totalorder %s21, 0
      %p65 = por %p63, %p64
      %p66 = scmp.ne.s32.totalorder %s52, %s53
      %p67 = scmp.eq.s32.totalorder %s22, 5
      %p68 = por %p66, %p67
      %p70 = scmp.ne.s32.totalorder %s53, %s69
      %p71 = scmp.eq.s32.totalorder %s22, 0
      %p72 = por %p70, %p71
      %s73 = ssub.s32 %s24, %s38
      %s74 = ssub.s32 %s25, %s34
      %s75 = sor.u32 %s73, %s74
      %p76 = scmp.eq.s32.totalorder %s75, 0
      %s78 = sadd.s32 %s77, 1
      %s79 = scalar_select %p76, %s77, %s78
      %p82 = pneg %p76
      %p83 = scmp.eq.s32.totalorder %s16, 5
      %p84 = por %p82, %p83
      %p85 = scmp.ne.s32.totalorder %s77, %s80
      %p86 = scmp.eq.s32.totalorder %s16, 0
      %p87 = por %p85, %p86
      %p88 = scmp.ne.s32.totalorder %s77, %s80
      %p89 = scmp.eq.s32.totalorder %s21, 5
      %p90 = por %p88, %p89
      %p91 = scmp.ne.s32.totalorder %s80, %s81
      %p92 = scmp.eq.s32.totalorder %s21, 0
      %p93 = por %p91, %p92
      %p94 = scmp.ne.s32.totalorder %s80, %s81
      %p95 = scmp.eq.s32.totalorder %s22, 5
      %p96 = por %p94, %p95
      %p98 = scmp.ne.s32.totalorder %s81, %s97
      %p99 = scmp.eq.s32.totalorder %s22, 0
      %p100 = por %p98, %p99
      %s101 = ssub.s32 %s23, %s42
      %p102 = scmp.eq.s32.totalorder %s101, 0
      %s104 = sadd.s32 %s103, 1
      %s105 = scalar_select %p102, %s103, %s104
      %p108 = pneg %p102
      %p109 = scmp.eq.s32.totalorder %s16, 5
      %p110 = por %p108, %p109
      %p111 = scmp.ne.s32.totalorder %s103, %s106
      %p112 = scmp.eq.s32.totalorder %s16, 0
      %p113 = por %p111, %p112
      %p114 = scmp.ne.s32.totalorder %s103, %s106
      %p115 = scmp.eq.s32.totalorder %s21, 5
      %p116 = por %p114, %p115
      %p117 = scmp.ne.s32.totalorder %s106, %s107
      %p118 = scmp.eq.s32.totalorder %s21, 0
      %p119 = por %p117, %p118
      %p120 = scmp.ne.s32.totalorder %s106, %s107
      %p121 = scmp.eq.s32.totalorder %s22, 5
      %p122 = por %p120, %p121
      %p124 = scmp.ne.s32.totalorder %s107, %s123
      %p125 = scmp.eq.s32.totalorder %s22, 0
      %p126 = por %p124, %p125
      %s128 = sadd.s32 %s127, 1
      %p131 = scmp.eq.s32.totalorder %s16, 5
      %p132 = scmp.ne.s32.totalorder %s127, %s129
      %p133 = scmp.eq.s32.totalorder %s16, 0
      %p134 = por %p132, %p133
      %p135 = scmp.ne.s32.totalorder %s127, %s129
      %p136 = scmp.eq.s32.totalorder %s21, 5
      %p137 = por %p135, %p136
      %p138 = scmp.ne.s32.totalorder %s129, %s130
      %p139 = scmp.eq.s32.totalorder %s21, 0
      %p140 = por %p138, %p139
      %p141 = scmp.ne.s32.totalorder %s129, %s130
      %p142 = scmp.eq.s32.totalorder %s22, 5
      %p143 = por %p141, %p142
      %p145 = scmp.ne.s32.totalorder %s130, %s144
      %p146 = scmp.eq.s32.totalorder %s22, 0
      %p147 = por %p145, %p146
      %s148 = ssub.s32 %s23, %s42
      %p149 = scmp.eq.s32.totalorder %s148, 0
      %s151 = sadd.s32 %s150, 1
      %s152 = scalar_select %p149, %s150, %s151
      %p155 = pneg %p149
      %p156 = scmp.eq.s32.totalorder %s16, 5
      %p157 = por %p155, %p156
      %p158 = scmp.ne.s32.totalorder %s150, %s153
      %p159 = scmp.eq.s32.totalorder %s16, 0
      %p160 = por %p158, %p159
      %p161 = scmp.ne.s32.totalorder %s150, %s153
      %p162 = scmp.eq.s32.totalorder %s21, 5
      %p163 = por %p161, %p162
      %p164 = scmp.ne.s32.totalorder %s153, %s154
      %p165 = scmp.eq.s32.totalorder %s21, 0
      %p166 = por %p164, %p165
      %p167 = scmp.ne.s32.totalorder %s153, %s154
      %p168 = scmp.eq.s32.totalorder %s22, 5
      %p169 = por %p167, %p168
      %p171 = scmp.ne.s32.totalorder %s154, %s170
      %p172 = scmp.eq.s32.totalorder %s22, 0
      %p173 = por %p171, %p172
      %p174 = scmp.le.s32.totalorder 1, %s16
      %p175 = scmp.lt.s32.totalorder %s16, 7
      %p176 = pnand %p174, %p175
      %p177 = pneg %p176
      // Predicated region
      $region9: #{rgcn_forward.3} parent=5 // pred_check
        _
      $region10: #{rgcn_forward.3} parent=5 // pred_check_branch
        %179 = sbr.rel (%p176) target = $region12
      $region11: #{rgcn_forward.3} parent=5 // pred_region
        %s180 = ssub.s32 %s16, 1
        // Predicated region
        $region13: #{rgcn_forward.3} parent=11 // pred_check
          %p181 = pneg %p140
        $region14: #{rgcn_forward.3} parent=11 // pred_check_branch
          %183 = sbr.rel (%p181) target = $region16
        $region15: #{rgcn_forward.3} parent=11 // pred_region
          _
        $region16: #{rgcn_forward.3} parent=11 // pred_fallthru
          _
      $region12: #{rgcn_forward.3} parent=5 // pred_fallthru
        _
      %p184 = scmp.lt.s32.totalorder %s16, 6
      // Predicated region
      $region17: #{rgcn_forward.3} parent=5 // pred_check
        %p185 = pneg %p184
      $region18: #{rgcn_forward.3} parent=5 // pred_check_branch
        %187 = sbr.rel (%p185) target = $region20
      $region19: #{rgcn_forward.3} parent=5 // pred_region
        // Predicated region
        $region21: #{rgcn_forward.3} parent=19 // pred_check
          %p188 = pneg %p59
        $region22: #{rgcn_forward.3} parent=19 // pred_check_branch
          %190 = sbr.rel (%p188) target = $region24
        $region23: #{rgcn_forward.3} parent=19 // pred_region
          %s191 = sand.u32 %s49, 1
          %s192 = scalar_lea.sflag [#allocation4], %s191
          %s193 = sand.u32 %s49, 1
          %s194 = smul.addr %s193, 128
          %s195 = scalar_lea.vmem [#allocation3], %s194
          %s196 = smul.u32 16, %s23
          %s197 = smul.u32 2, %s25
          %s199 = ssub.s32 2048, 2048
          %200 = vsyncadd %s192, %s199
          %s201 = smul.addr %s196, 2
          %s202 = sadd.s32 %s197, %s201
          %s203 = smul.addr %s24, 64
          %s204 = sadd.s32 %s202, %s203
          %s205 = smul.addr %s204, 64
          %s206 = scalar_lea.hbm %s0, %s205
          %s207 = sshll.u32 %s195, 4
          %s208 = int_to_ptr.vmem [resolvable:$true] %s207
          %213 = dma.hbm_to_vmem [thread:$0]  %s206, 2048, %s208, %s192, 128, 128, 8
        $region24: #{rgcn_forward.3} parent=19 // pred_fallthru
          _
        // Predicated region
        $region25: #{rgcn_forward.3} parent=19 // pred_check
          %p214 = pneg %p87
        $region26: #{rgcn_forward.3} parent=19 // pred_check_branch
          %216 = sbr.rel (%p214) target = $region28
        $region27: #{rgcn_forward.3} parent=19 // pred_region
          %s217 = sand.u32 %s16, 1
          %s218 = scalar_lea.sflag [#allocation6], %s217
          %s219 = sand.u32 %s77, 1
          %s220 = smul.addr %s219, 128
          %s221 = scalar_lea.vmem [#allocation5], %s220
          %s222 = smul.u32 32, %s25
          %s224 = ssub.s32 2048, 2048
          %225 = vsyncadd %s218, %s224
          %s226 = smul.addr %s24, 32
          %s227 = sadd.s32 %s222, %s226
          %s228 = smul.addr %s227, 64
          %s229 = scalar_lea.hbm %s1, %s228
          %s230 = sshll.u32 %s221, 4
          %s231 = int_to_ptr.vmem [resolvable:$true] %s230
          %236 = dma.hbm_to_vmem [thread:$0]  %s229, 2048, %s231, %s218, 64, 64, 4
        $region28: #{rgcn_forward.3} parent=19 // pred_fallthru
          _
        // Predicated region
        $region29: #{rgcn_forward.3} parent=19 // pred_check
          %p237 = pneg %p113
        $region30: #{rgcn_forward.3} parent=19 // pred_check_branch
          %239 = sbr.rel (%p237) target = $region32
        $region31: #{rgcn_forward.3} parent=19 // pred_region
          %s240 = sand.u32 %s16, 1
          %s241 = scalar_lea.sflag [#allocation6], %s240
          %s242 = sand.u32 %s103, 1
          %s243 = smul.addr %s242, 64
          %s244 = scalar_lea.vmem [#allocation7], %s243
          %s245 = smul.u32 16, %s23
          %s247 = ssub.s32 1024, 1024
          %248 = vsyncadd %s241, %s247
          %s249 = smul.addr %s245, 64
          %s250 = scalar_lea.hbm %s2, %s249
          %s251 = sshll.u32 %s244, 4
          %s252 = int_to_ptr.vmem [resolvable:$true] %s251
          %257 = dma.hbm_to_vmem [thread:$0]  %s250, 1024, %s252, %s241, 64, 64, 4
        $region32: #{rgcn_forward.3} parent=19 // pred_fallthru
          _
      $region20: #{rgcn_forward.3} parent=5 // pred_fallthru
        _
      %p258 = scmp.le.s32.totalorder 1, %s16
      %p259 = scmp.lt.s32.totalorder %s16, 7
      %p260 = pnand %p258, %p259
      %p261 = pneg %p260
      // Predicated region
      $region33: #{rgcn_forward.3} parent=5 // pred_check
        _
      $region34: #{rgcn_forward.3} parent=5 // pred_check_branch
        %263 = sbr.rel (%p260) target = $region36
      $region35: #{rgcn_forward.3} parent=5 // pred_region
        %s264 = ssub.s32 %s16, 1
        %s265 = sand.u32 %s52, 1
        %s266 = scalar_lea.sflag [#allocation4], %s265
        %s267 = sand.u32 %s52, 1
        %s268 = smul.addr %s267, 128
        %s269 = scalar_lea.vmem [#allocation3], %s268
        // Predicated region
        $region37: #{rgcn_forward.3} parent=35 // pred_check
          %p270 = pneg %p65
        $region38: #{rgcn_forward.3} parent=35 // pred_check_branch
          %272 = sbr.rel (%p270) target = $region40
        $region39: #{rgcn_forward.3} parent=35 // pred_region
          %273 = dma.done %s266, 2048
        $region40: #{rgcn_forward.3} parent=35 // pred_fallthru
          _
        %s274 = sand.u32 %s21, 1
        %s275 = scalar_lea.sflag [#allocation6], %s274
        %s276 = sand.u32 %s80, 1
        %s277 = smul.addr %s276, 128
        %s278 = scalar_lea.vmem [#allocation5], %s277
        // Predicated region
        $region41: #{rgcn_forward.3} parent=35 // pred_check
          %p279 = pneg %p93
        $region42: #{rgcn_forward.3} parent=35 // pred_check_branch
          %281 = sbr.rel (%p279) target = $region44
        $region43: #{rgcn_forward.3} parent=35 // pred_region
          %282 = dma.done %s275, 2048
        $region44: #{rgcn_forward.3} parent=35 // pred_fallthru
          _
        %s283 = sand.u32 %s21, 1
        %s284 = scalar_lea.sflag [#allocation6], %s283
        %s285 = sand.u32 %s106, 1
        %s286 = smul.addr %s285, 64
        %s287 = scalar_lea.vmem [#allocation7], %s286
        // Predicated region
        $region45: #{rgcn_forward.3} parent=35 // pred_check
          %p288 = pneg %p119
        $region46: #{rgcn_forward.3} parent=35 // pred_check_branch
          %290 = sbr.rel (%p288) target = $region48
        $region47: #{rgcn_forward.3} parent=35 // pred_region
          %291 = dma.done %s284, 1024
        $region48: #{rgcn_forward.3} parent=35 // pred_fallthru
          _
        %s292 = sand.u32 %s52, 1
        %s293 = scalar_lea.sflag [#allocation4], %s292
        %s294 = sand.u32 %s52, 1
        %s295 = smul.addr %s294, 128
        %s296 = scalar_lea.vmem [#allocation3], %s295
        %p297 = pneg %p65
        %p298 = pneg %p62
        %s299 = sand.u32 %s21, 1
        %s300 = scalar_lea.sflag [#allocation6], %s299
        %s301 = sand.u32 %s80, 1
        %s302 = smul.addr %s301, 128
        %s303 = scalar_lea.vmem [#allocation5], %s302
        %p304 = pneg %p93
        %p305 = pneg %p90
        %s306 = sand.u32 %s21, 1
        %s307 = scalar_lea.sflag [#allocation6], %s306
        %s308 = sand.u32 %s106, 1
        %s309 = smul.addr %s308, 64
        %s310 = scalar_lea.vmem [#allocation7], %s309
        %p311 = pneg %p119
        %p312 = pneg %p116
        %p313 = pneg %p140
        %p314 = pneg %p137
        %p315 = pneg %p166
        %p316 = pneg %p163
        %s317 = smul.u32 16, %s26
        %p318 = scmp.lt.s32.totalorder %s317, 31
        %s319 = scalar_select %p318, %s317, 31
        %s320 = smul.addr %s319, 4
        %s321 = scalar_lea.vmem %s4, %s320
        %s322 = smul.u32 16, %s26
        %s323 = smul.u32 2, %s28
        %s324 = smul.u32 32, %s28
        %s325 = smul.u32 16, %s26
        %s326 = smul.u32 16, %s26
        %p327 = scmp.lt.s32.totalorder %s326, 31
        %s328 = scalar_select %p327, %s326, 31
        %s329 = smul.addr %s328, 4
        %s330 = scalar_lea.vmem %s4, %s329
        %s331 = smul.u32 16, %s26
        %p333 = scmp.eq.s32.totalorder %s27, 0
        %p334 = scmp.eq.s32.totalorder %s28, 0
        %p335 = pnand %p333, %p334
        %p336 = pneg %p335
        // Predicated region
        $region49: #{rgcn_forward.3} parent=35 // pred_check
          _
        $region50: #{rgcn_forward.3} parent=35 // pred_check_branch
          %338 = sbr.rel (%p335) target = $region52
        $region51: #{rgcn_forward.3} parent=35 // pred_region
          %339 = vst [vmem:[#allocation2] sm:$0xff] 0.0
          %340 = vst [vmem:[#allocation2 + $0x8] sm:$0xff] 0.0
          %341 = vst [vmem:[#allocation2 + $0x10] sm:$0xff] 0.0
          %342 = vst [vmem:[#allocation2 + $0x18] sm:$0xff] 0.0
          %343 = vst [vmem:[#allocation2 + $0x20] sm:$0xff] 0.0
          %344 = vst [vmem:[#allocation2 + $0x28] sm:$0xff] 0.0
          %345 = vst [vmem:[#allocation2 + $0x30] sm:$0xff] 0.0
          %346 = vst [vmem:[#allocation2 + $0x38] sm:$0xff] 0.0
          %347 = vst [vmem:[#allocation2 + $0x40] sm:$0xff] 0.0
          %348 = vst [vmem:[#allocation2 + $0x48] sm:$0xff] 0.0
          %349 = vst [vmem:[#allocation2 + $0x50] sm:$0xff] 0.0
          %350 = vst [vmem:[#allocation2 + $0x58] sm:$0xff] 0.0
          %351 = vst [vmem:[#allocation2 + $0x60] sm:$0xff] 0.0
          %352 = vst [vmem:[#allocation2 + $0x68] sm:$0xff] 0.0
          %353 = vst [vmem:[#allocation2 + $0x70] sm:$0xff] 0.0
          %354 = vst [vmem:[#allocation2 + $0x78] sm:$0xff] 0.0
        $region52: #{rgcn_forward.3} parent=35 // pred_fallthru
          _
        %v355 = vld [vmem:[#allocation2] sm:$0xff]
        %v356 = vld [vmem:[#allocation2 + $0x8] sm:$0xff]
        %v357 = vld [vmem:[#allocation2 + $0x10] sm:$0xff]
        %v358 = vld [vmem:[#allocation2 + $0x18] sm:$0xff]
        %v359 = vld [vmem:[#allocation2 + $0x20] sm:$0xff]
        %v360 = vld [vmem:[#allocation2 + $0x28] sm:$0xff]
        %v361 = vld [vmem:[#allocation2 + $0x30] sm:$0xff]
        %v362 = vld [vmem:[#allocation2 + $0x38] sm:$0xff]
        %v363 = vld [vmem:[#allocation2 + $0x40] sm:$0xff]
        %v364 = vld [vmem:[#allocation2 + $0x48] sm:$0xff]
        %v365 = vld [vmem:[#allocation2 + $0x50] sm:$0xff]
        %v366 = vld [vmem:[#allocation2 + $0x58] sm:$0xff]
        %v367 = vld [vmem:[#allocation2 + $0x60] sm:$0xff]
        %v368 = vld [vmem:[#allocation2 + $0x68] sm:$0xff]
        %v369 = vld [vmem:[#allocation2 + $0x70] sm:$0xff]
        %v370 = vld [vmem:[#allocation2 + $0x78] sm:$0xff]
        %v371 = vld [vmem:[%s269] sm:$0xff]
        %v372 = vld [vmem:[%s269 + $0x8] sm:$0xff]
        %v373 = vld [vmem:[%s269 + $0x10] sm:$0xff]
        %v374 = vld [vmem:[%s269 + $0x18] sm:$0xff]
        %v375 = vld [vmem:[%s269 + $0x20] sm:$0xff]
        %v376 = vld [vmem:[%s269 + $0x28] sm:$0xff]
        %v377 = vld [vmem:[%s269 + $0x30] sm:$0xff]
        %v378 = vld [vmem:[%s269 + $0x38] sm:$0xff]
        %v379 = vld [vmem:[%s269 + $0x40] sm:$0xff]
        %v380 = vld [vmem:[%s269 + $0x48] sm:$0xff]
        %v381 = vld [vmem:[%s269 + $0x50] sm:$0xff]
        %v382 = vld [vmem:[%s269 + $0x58] sm:$0xff]
        %v383 = vld [vmem:[%s269 + $0x60] sm:$0xff]
        %v384 = vld [vmem:[%s269 + $0x68] sm:$0xff]
        %v385 = vld [vmem:[%s269 + $0x70] sm:$0xff]
        %v386 = vld [vmem:[%s269 + $0x78] sm:$0xff]
        %v387 = vld [vmem:[%s278] sm:$0xf]
        %v388 = vld [vmem:[%s278 + $0x4] sm:$0xf]
        %v389 = vld [vmem:[%s278 + $0x8] sm:$0xf]
        %v390 = vld [vmem:[%s278 + $0xc] sm:$0xf]
        %v391 = vld [vmem:[%s278 + $0x10] sm:$0xf]
        %v392 = vld [vmem:[%s278 + $0x14] sm:$0xf]
        %v393 = vld [vmem:[%s278 + $0x18] sm:$0xf]
        %v394 = vld [vmem:[%s278 + $0x1c] sm:$0xf]
        %v395 = vld [vmem:[%s278 + $0x20] sm:$0xf]
        %v396 = vld [vmem:[%s278 + $0x24] sm:$0xf]
        %v397 = vld [vmem:[%s278 + $0x28] sm:$0xf]
        %v398 = vld [vmem:[%s278 + $0x2c] sm:$0xf]
        %v399 = vld [vmem:[%s278 + $0x30] sm:$0xf]
        %v400 = vld [vmem:[%s278 + $0x34] sm:$0xf]
        %v401 = vld [vmem:[%s278 + $0x38] sm:$0xf]
        %v402 = vld [vmem:[%s278 + $0x3c] sm:$0xf]
        %v403 = vld [vmem:[%s278 + $0x40] sm:$0xf]
        %v404 = vld [vmem:[%s278 + $0x44] sm:$0xf]
        %v405 = vld [vmem:[%s278 + $0x48] sm:$0xf]
        %v406 = vld [vmem:[%s278 + $0x4c] sm:$0xf]
        %v407 = vld [vmem:[%s278 + $0x50] sm:$0xf]
        %v408 = vld [vmem:[%s278 + $0x54] sm:$0xf]
        %v409 = vld [vmem:[%s278 + $0x58] sm:$0xf]
        %v410 = vld [vmem:[%s278 + $0x5c] sm:$0xf]
        %v411 = vld [vmem:[%s278 + $0x60] sm:$0xf]
        %v412 = vld [vmem:[%s278 + $0x64] sm:$0xf]
        %v413 = vld [vmem:[%s278 + $0x68] sm:$0xf]
        %v414 = vld [vmem:[%s278 + $0x6c] sm:$0xf]
        %v415 = vld [vmem:[%s278 + $0x70] sm:$0xf]
        %v416 = vld [vmem:[%s278 + $0x74] sm:$0xf]
        %v417 = vld [vmem:[%s278 + $0x78] sm:$0xf]
        %v418 = vld [vmem:[%s278 + $0x7c] sm:$0xf]
        %v435 = vunpack.c.l.b16 %v371
        %v436 = vunpack.c.h.b16 %v371
        %v437 = vunpack.c.l.b16 %v372
        %v438 = vunpack.c.h.b16 %v372
        %v439 = vunpack.c.l.b16 %v373
        %v440 = vunpack.c.h.b16 %v373
        %v441 = vunpack.c.l.b16 %v374
        %v442 = vunpack.c.h.b16 %v374
        %v443 = vunpack.c.l.b16 %v375
        %v444 = vunpack.c.h.b16 %v375
        %v445 = vunpack.c.l.b16 %v376
        %v446 = vunpack.c.h.b16 %v376
        %v447 = vunpack.c.l.b16 %v377
        %v448 = vunpack.c.h.b16 %v377
        %v449 = vunpack.c.l.b16 %v378
        %v450 = vunpack.c.h.b16 %v378
        %v451 = vunpack.c.l.b16 %v379
        %v452 = vunpack.c.h.b16 %v379
        %v453 = vunpack.c.l.b16 %v380
        %v454 = vunpack.c.h.b16 %v380
        %v455 = vunpack.c.l.b16 %v381
        %v456 = vunpack.c.h.b16 %v381
        %v457 = vunpack.c.l.b16 %v382
        %v458 = vunpack.c.h.b16 %v382
        %v459 = vunpack.c.l.b16 %v383
        %v460 = vunpack.c.h.b16 %v383
        %v461 = vunpack.c.l.b16 %v384
        %v462 = vunpack.c.h.b16 %v384
        %v463 = vunpack.c.l.b16 %v385
        %v464 = vunpack.c.h.b16 %v385
        %v465 = vunpack.c.l.b16 %v386
        %v466 = vunpack.c.h.b16 %v386
        %v467 = vpack.c.b16 %v437, %v435
        %v468 = vpack.c.b16 %v438, %v436
        %v469 = vpack.c.b16 %v441, %v439
        %v470 = vpack.c.b16 %v442, %v440
        %v471 = vpack.c.b16 %v445, %v443
        %v472 = vpack.c.b16 %v446, %v444
        %v473 = vpack.c.b16 %v449, %v447
        %v474 = vpack.c.b16 %v450, %v448
        %v475 = vpack.c.b16 %v453, %v451
        %v476 = vpack.c.b16 %v454, %v452
        %v477 = vpack.c.b16 %v457, %v455
        %v478 = vpack.c.b16 %v458, %v456
        %v479 = vpack.c.b16 %v461, %v459
        %v480 = vpack.c.b16 %v462, %v460
        %v481 = vpack.c.b16 %v465, %v463
        %v482 = vpack.c.b16 %v466, %v464
        %v531 = vunpack.c.l.b16 %v387
        %v532 = vunpack.c.l.b16 %v388
        %v533 = vunpack.c.l.b16 %v389
        %v534 = vunpack.c.l.b16 %v390
        %v535 = vunpack.c.l.b16 %v391
        %v536 = vunpack.c.l.b16 %v392
        %v537 = vunpack.c.l.b16 %v393
        %v538 = vunpack.c.l.b16 %v394
        %v539 = vunpack.c.l.b16 %v395
        %v540 = vunpack.c.l.b16 %v396
        %v541 = vunpack.c.l.b16 %v397
        %v542 = vunpack.c.l.b16 %v398
        %v543 = vunpack.c.l.b16 %v399
        %v544 = vunpack.c.l.b16 %v400
        %v545 = vunpack.c.l.b16 %v401
        %v546 = vunpack.c.l.b16 %v402
        %v547 = vunpack.c.l.b16 %v403
        %v548 = vunpack.c.l.b16 %v404
        %v549 = vunpack.c.l.b16 %v405
        %v550 = vunpack.c.l.b16 %v406
        %v551 = vunpack.c.l.b16 %v407
        %v552 = vunpack.c.l.b16 %v408
        %v553 = vunpack.c.l.b16 %v409
        %v554 = vunpack.c.l.b16 %v410
        %v555 = vunpack.c.l.b16 %v411
        %v556 = vunpack.c.l.b16 %v412
        %v557 = vunpack.c.l.b16 %v413
        %v558 = vunpack.c.l.b16 %v414
        %v559 = vunpack.c.l.b16 %v415
        %v560 = vunpack.c.l.b16 %v416
        %v561 = vunpack.c.l.b16 %v417
        %v562 = vunpack.c.l.b16 %v418
        %v563 = vpack.c.b16 %v532, %v531
        %v564 = vpack.c.b16 %v534, %v533
        %v565 = vpack.c.b16 %v536, %v535
        %v566 = vpack.c.b16 %v538, %v537
        %v567 = vpack.c.b16 %v540, %v539
        %v568 = vpack.c.b16 %v542, %v541
        %v569 = vpack.c.b16 %v544, %v543
        %v570 = vpack.c.b16 %v546, %v545
        %v571 = vpack.c.b16 %v548, %v547
        %v572 = vpack.c.b16 %v550, %v549
        %v573 = vpack.c.b16 %v552, %v551
        %v574 = vpack.c.b16 %v554, %v553
        %v575 = vpack.c.b16 %v556, %v555
        %v576 = vpack.c.b16 %v558, %v557
        %v577 = vpack.c.b16 %v560, %v559
        %v578 = vpack.c.b16 %v562, %v561
        %595 = vmatprep.subr.bf16.mxu0 0
        %596 = vmatpush1.bf16.msra.mxu0 %v563
        %597 = vmatprep.subr.bf16.mxu0 0
        %598 = vmatpush1.bf16.msra.mxu0 %v564
        %599 = vmatprep.subr.bf16.mxu0 0
        %600 = vmatpush1.bf16.msra.mxu0 %v565
        %601 = vmatprep.subr.bf16.mxu0 0
        %602 = vmatpush1.bf16.msra.mxu0 %v566
        %603 = vmatprep.subr.bf16.mxu0 0
        %604 = vmatpush1.bf16.msra.mxu0 %v567
        %605 = vmatprep.subr.bf16.mxu0 0
        %606 = vmatpush1.bf16.msra.mxu0 %v568
        %607 = vmatprep.subr.bf16.mxu0 0
        %608 = vmatpush1.bf16.msra.mxu0 %v569
        %609 = vmatprep.subr.bf16.mxu0 0
        %610 = vmatpush1.bf16.msra.mxu0 %v570
        %611 = vmatprep.subr.bf16.mxu0 0
        %612 = vmatpush1.bf16.msra.mxu0 %v571
        %613 = vmatprep.subr.bf16.mxu0 0
        %614 = vmatpush1.bf16.msra.mxu0 %v572
        %615 = vmatprep.subr.bf16.mxu0 0
        %616 = vmatpush1.bf16.msra.mxu0 %v573
        %617 = vmatprep.subr.bf16.mxu0 0
        %618 = vmatpush1.bf16.msra.mxu0 %v574
        %619 = vmatprep.subr.bf16.mxu0 0
        %620 = vmatpush1.bf16.msra.mxu0 %v575
        %621 = vmatprep.subr.bf16.mxu0 0
        %622 = vmatpush1.bf16.msra.mxu0 %v576
        %623 = vmatprep.subr.bf16.mxu0 0
        %624 = vmatpush1.bf16.msra.mxu0 %v577
        %625 = vmatprep.subr.bf16.mxu0 0
        %626 = vmatpush1.bf16.msra.mxu0 %v578
        %627 = vmatprep.mubr.bf16.mxu0 %v468
        %628 = vmatmul.mubr.bf16.gmra.mrb[0].mxu0 %v467
        %v629 = vpop.f32.mrb[0].mxu0
        %v630 = vadd.f32 0.0, %v629
        %v631 = vpop.f32.mrb[0].mxu0
        %v632 = vpop.f32.mrb[0].mxu0
        %v633 = vadd.f32 0.0, %v632
        %v634 = vpop.f32.mrb[0].mxu0
        %635 = vmatprep.mubr.bf16.mxu0 %v470
        %636 = vmatmul.mubr.bf16.gmra.mrb[0].mxu0 %v469
        %v637 = vpop.f32.mrb[0].mxu0
        %v638 = vadd.f32 0.0, %v637
        %v639 = vpop.f32.mrb[0].mxu0
        %v640 = vpop.f32.mrb[0].mxu0
        %v641 = vadd.f32 0.0, %v640
        %v642 = vpop.f32.mrb[0].mxu0
        %643 = vmatprep.mubr.bf16.mxu0 %v472
        %644 = vmatmul.mubr.bf16.gmra.mrb[0].mxu0 %v471
        %v645 = vpop.f32.mrb[0].mxu0
        %v646 = vadd.f32 0.0, %v645
        %v647 = vpop.f32.mrb[0].mxu0
        %v648 = vpop.f32.mrb[0].mxu0
        %v649 = vadd.f32 0.0, %v648
        %v650 = vpop.f32.mrb[0].mxu0
        %651 = vmatprep.mubr.bf16.mxu0 %v474
        %652 = vmatmul.mubr.bf16.gmra.mrb[0].mxu0 %v473
        %v653 = vpop.f32.mrb[0].mxu0
        %v654 = vadd.f32 0.0, %v653
        %v655 = vpop.f32.mrb[0].mxu0
        %v656 = vpop.f32.mrb[0].mxu0
        %v657 = vadd.f32 0.0, %v656
        %v658 = vpop.f32.mrb[0].mxu0
        %659 = vmatprep.mubr.bf16.mxu0 %v476
        %660 = vmatmul.mubr.bf16.gmra.mrb[0].mxu0 %v475
        %v661 = vpop.f32.mrb[0].mxu0
        %v662 = vadd.f32 0.0, %v661
        %v663 = vpop.f32.mrb[0].mxu0
        %v664 = vpop.f32.mrb[0].mxu0
        %v665 = vadd.f32 0.0, %v664
        %v666 = vpop.f32.mrb[0].mxu0
        %667 = vmatprep.mubr.bf16.mxu0 %v478
        %668 = vmatmul.mubr.bf16.gmra.mrb[0].mxu0 %v477
        %v669 = vpop.f32.mrb[0].mxu0
        %v670 = vadd.f32 0.0, %v669
        %v671 = vpop.f32.mrb[0].mxu0
        %v672 = vpop.f32.mrb[0].mxu0
        %v673 = vadd.f32 0.0, %v672
        %v674 = vpop.f32.mrb[0].mxu0
        %675 = vmatprep.mubr.bf16.mxu0 %v480
        %676 = vmatmul.mubr.bf16.gmra.mrb[0].mxu0 %v479
        %v677 = vpop.f32.mrb[0].mxu0
        %v678 = vadd.f32 0.0, %v677
        %v679 = vpop.f32.mrb[0].mxu0
        %v680 = vpop.f32.mrb[0].mxu0
        %v681 = vadd.f32 0.0, %v680
        %v682 = vpop.f32.mrb[0].mxu0
        %683 = vmatprep.mubr.bf16.mxu0 %v482
        %684 = vmatmul.mubr.bf16.gmra.mrb[0].mxu0 %v481
        %v685 = vpop.f32.mrb[0].mxu0
        %v686 = vadd.f32 0.0, %v685
        %v687 = vpop.f32.mrb[0].mxu0
        %v688 = vpop.f32.mrb[0].mxu0
        %v689 = vadd.f32 0.0, %v688
        %v690 = vpop.f32.mrb[0].mxu0
        %691 = vdwg.mxu0
        %v692 = vadd.f32 %v355, %v630
        %v693 = vadd.f32 %v356, %v633
        %v694 = vadd.f32 %v357, %v638
        %v695 = vadd.f32 %v358, %v641
        %v696 = vadd.f32 %v359, %v646
        %v697 = vadd.f32 %v360, %v649
        %v698 = vadd.f32 %v361, %v654
        %v699 = vadd.f32 %v362, %v657
        %v700 = vadd.f32 %v363, %v662
        %v701 = vadd.f32 %v364, %v665
        %v702 = vadd.f32 %v365, %v670
        %v703 = vadd.f32 %v366, %v673
        %v704 = vadd.f32 %v367, %v678
        %v705 = vadd.f32 %v368, %v681
        %v706 = vadd.f32 %v369, %v686
        %v707 = vadd.f32 %v370, %v689
        %708 = vst [vmem:[#allocation2] sm:$0xff] %v692
        %709 = vst [vmem:[#allocation2 + $0x8] sm:$0xff] %v693
        %710 = vst [vmem:[#allocation2 + $0x10] sm:$0xff] %v694
        %711 = vst [vmem:[#allocation2 + $0x18] sm:$0xff] %v695
        %712 = vst [vmem:[#allocation2 + $0x20] sm:$0xff] %v696
        %713 = vst [vmem:[#allocation2 + $0x28] sm:$0xff] %v697
        %714 = vst [vmem:[#allocation2 + $0x30] sm:$0xff] %v698
        %715 = vst [vmem:[#allocation2 + $0x38] sm:$0xff] %v699
        %716 = vst [vmem:[#allocation2 + $0x40] sm:$0xff] %v700
        %717 = vst [vmem:[#allocation2 + $0x48] sm:$0xff] %v701
        %718 = vst [vmem:[#allocation2 + $0x50] sm:$0xff] %v702
        %719 = vst [vmem:[#allocation2 + $0x58] sm:$0xff] %v703
        %720 = vst [vmem:[#allocation2 + $0x60] sm:$0xff] %v704
        %721 = vst [vmem:[#allocation2 + $0x68] sm:$0xff] %v705
        %722 = vst [vmem:[#allocation2 + $0x70] sm:$0xff] %v706
        %723 = vst [vmem:[#allocation2 + $0x78] sm:$0xff] %v707
        %p724 = scmp.eq.s32.totalorder %s27, 2
        %p725 = pnand %p724, %p334
        %p726 = pneg %p725
        // Predicated region
        $region53: #{rgcn_forward.3} parent=35 // pred_check
          _
        $region54: #{rgcn_forward.3} parent=35 // pred_check_branch
          %728 = sbr.rel (%p725) target = $region56
        $region55: #{rgcn_forward.3} parent=35 // pred_region
          %v729 = vld [vmem:[#allocation2] sm:$0xff]
          %v730 = vld [vmem:[#allocation2 + $0x8] sm:$0xff]
          %v731 = vld [vmem:[#allocation2 + $0x10] sm:$0xff]
          %v732 = vld [vmem:[#allocation2 + $0x18] sm:$0xff]
          %v733 = vld [vmem:[#allocation2 + $0x20] sm:$0xff]
          %v734 = vld [vmem:[#allocation2 + $0x28] sm:$0xff]
          %v735 = vld [vmem:[#allocation2 + $0x30] sm:$0xff]
          %v736 = vld [vmem:[#allocation2 + $0x38] sm:$0xff]
          %v737 = vld [vmem:[#allocation2 + $0x40] sm:$0xff]
          %v738 = vld [vmem:[#allocation2 + $0x48] sm:$0xff]
          %v739 = vld [vmem:[#allocation2 + $0x50] sm:$0xff]
          %v740 = vld [vmem:[#allocation2 + $0x58] sm:$0xff]
          %v741 = vld [vmem:[#allocation2 + $0x60] sm:$0xff]
          %v742 = vld [vmem:[#allocation2 + $0x68] sm:$0xff]
          %v743 = vld [vmem:[#allocation2 + $0x70] sm:$0xff]
          %v744 = vld [vmem:[#allocation2 + $0x78] sm:$0xff]
          %v745 = vld [vmem:[%s287] sm:$0xf]
          %v746 = vld [vmem:[%s287 + $0x4] sm:$0xf]
          %v747 = vld [vmem:[%s287 + $0x8] sm:$0xf]
          %v748 = vld [vmem:[%s287 + $0xc] sm:$0xf]
          %v749 = vld [vmem:[%s287 + $0x10] sm:$0xf]
          %v750 = vld [vmem:[%s287 + $0x14] sm:$0xf]
          %v751 = vld [vmem:[%s287 + $0x18] sm:$0xf]
          %v752 = vld [vmem:[%s287 + $0x1c] sm:$0xf]
          %v753 = vld [vmem:[%s287 + $0x20] sm:$0xf]
          %v754 = vld [vmem:[%s287 + $0x24] sm:$0xf]
          %v755 = vld [vmem:[%s287 + $0x28] sm:$0xf]
          %v756 = vld [vmem:[%s287 + $0x2c] sm:$0xf]
          %v757 = vld [vmem:[%s287 + $0x30] sm:$0xf]
          %v758 = vld [vmem:[%s287 + $0x34] sm:$0xf]
          %v759 = vld [vmem:[%s287 + $0x38] sm:$0xf]
          %v760 = vld [vmem:[%s287 + $0x3c] sm:$0xf]
          %v761 = vunpack.c.l.bf16 %v745
          %v762 = vunpack.c.l.bf16 %v746
          %v763 = vunpack.c.l.bf16 %v747
          %v764 = vunpack.c.l.bf16 %v748
          %v765 = vunpack.c.l.bf16 %v749
          %v766 = vunpack.c.l.bf16 %v750
          %v767 = vunpack.c.l.bf16 %v751
          %v768 = vunpack.c.l.bf16 %v752
          %v769 = vunpack.c.l.bf16 %v753
          %v770 = vunpack.c.l.bf16 %v754
          %v771 = vunpack.c.l.bf16 %v755
          %v772 = vunpack.c.l.bf16 %v756
          %v773 = vunpack.c.l.bf16 %v757
          %v774 = vunpack.c.l.bf16 %v758
          %v775 = vunpack.c.l.bf16 %v759
          %v776 = vunpack.c.l.bf16 %v760
          %v777 = vadd.f32 %v729, %v761
          %v778 = vadd.f32 %v730, %v762
          %v779 = vadd.f32 %v731, %v763
          %v780 = vadd.f32 %v732, %v764
          %v781 = vadd.f32 %v733, %v765
          %v782 = vadd.f32 %v734, %v766
          %v783 = vadd.f32 %v735, %v767
          %v784 = vadd.f32 %v736, %v768
          %v785 = vadd.f32 %v737, %v769
          %v786 = vadd.f32 %v738, %v770
          %v787 = vadd.f32 %v739, %v771
          %v788 = vadd.f32 %v740, %v772
          %v789 = vadd.f32 %v741, %v773
          %v790 = vadd.f32 %v742, %v774
          %v791 = vadd.f32 %v743, %v775
          %v792 = vadd.f32 %v744, %v776
          %v793 = vld [vmem:[%s3] sm:$0x1]
          %v795 = vlaneseq
          %v796 = vshrl.u32 %v795, 7
          %v797 = vsub.s32 0, %v796
          %v798 = vrot.slane %v793, %v797
          %v800 = vadd.f32 %v777, %v798
          %v801 = vadd.f32 %v778, %v798
          %v802 = vadd.f32 %v779, %v798
          %v803 = vadd.f32 %v780, %v798
          %v804 = vadd.f32 %v781, %v798
          %v805 = vadd.f32 %v782, %v798
          %v806 = vadd.f32 %v783, %v798
          %v807 = vadd.f32 %v784, %v798
          %v808 = vadd.f32 %v785, %v798
          %v809 = vadd.f32 %v786, %v798
          %v810 = vadd.f32 %v787, %v798
          %v811 = vadd.f32 %v788, %v798
          %v812 = vadd.f32 %v789, %v798
          %v813 = vadd.f32 %v790, %v798
          %v814 = vadd.f32 %v791, %v798
          %v815 = vadd.f32 %v792, %v798
          %vm816 = vcmp.ge.f32.partialorder %v800, 0.0
          %vm817 = vcmp.ge.f32.partialorder %v801, 0.0
          %vm818 = vcmp.ge.f32.partialorder %v802, 0.0
          %vm819 = vcmp.ge.f32.partialorder %v803, 0.0
          %vm820 = vcmp.ge.f32.partialorder %v804, 0.0
          %vm821 = vcmp.ge.f32.partialorder %v805, 0.0
          %vm822 = vcmp.ge.f32.partialorder %v806, 0.0
          %vm823 = vcmp.ge.f32.partialorder %v807, 0.0
          %vm824 = vcmp.ge.f32.partialorder %v808, 0.0
          %vm825 = vcmp.ge.f32.partialorder %v809, 0.0
          %vm826 = vcmp.ge.f32.partialorder %v810, 0.0
          %vm827 = vcmp.ge.f32.partialorder %v811, 0.0
          %vm828 = vcmp.ge.f32.partialorder %v812, 0.0
          %vm829 = vcmp.ge.f32.partialorder %v813, 0.0
          %vm830 = vcmp.ge.f32.partialorder %v814, 0.0
          %vm831 = vcmp.ge.f32.partialorder %v815, 0.0
          %v832 = vmul.f32 %v800, 0.01
          %v833 = vmul.f32 %v801, 0.01
          %v834 = vmul.f32 %v802, 0.01
          %v835 = vmul.f32 %v803, 0.01
          %v836 = vmul.f32 %v804, 0.01
          %v837 = vmul.f32 %v805, 0.01
          %v838 = vmul.f32 %v806, 0.01
          %v839 = vmul.f32 %v807, 0.01
          %v840 = vmul.f32 %v808, 0.01
          %v841 = vmul.f32 %v809, 0.01
          %v842 = vmul.f32 %v810, 0.01
          %v843 = vmul.f32 %v811, 0.01
          %v844 = vmul.f32 %v812, 0.01
          %v845 = vmul.f32 %v813, 0.01
          %v846 = vmul.f32 %v814, 0.01
          %v847 = vmul.f32 %v815, 0.01
          %v848 = vsel %vm816, %v800, %v832
          %v849 = vsel %vm817, %v801, %v833
          %v850 = vsel %vm818, %v802, %v834
          %v851 = vsel %vm819, %v803, %v835
          %v852 = vsel %vm820, %v804, %v836
          %v853 = vsel %vm821, %v805, %v837
          %v854 = vsel %vm822, %v806, %v838
          %v855 = vsel %vm823, %v807, %v839
          %v856 = vsel %vm824, %v808, %v840
          %v857 = vsel %vm825, %v809, %v841
          %v858 = vsel %vm826, %v810, %v842
          %v859 = vsel %vm827, %v811, %v843
          %v860 = vsel %vm828, %v812, %v844
          %v861 = vsel %vm829, %v813, %v845
          %v862 = vsel %vm830, %v814, %v846
          %v863 = vsel %vm831, %v815, %v847
          %v864 = vpack.c.bf16 %v849, %v848
          %v865 = vpack.c.bf16 %v851, %v850
          %v866 = vpack.c.bf16 %v853, %v852
          %v867 = vpack.c.bf16 %v855, %v854
          %v868 = vpack.c.bf16 %v857, %v856
          %v869 = vpack.c.bf16 %v859, %v858
          %v870 = vpack.c.bf16 %v861, %v860
          %v871 = vpack.c.bf16 %v863, %v862
          %v880 = vunpack.c.l.b16 %v864
          %v881 = vunpack.c.h.b16 %v864
          %v882 = vunpack.c.l.b16 %v865
          %v883 = vunpack.c.h.b16 %v865
          %v884 = vunpack.c.l.b16 %v866
          %v885 = vunpack.c.h.b16 %v866
          %v886 = vunpack.c.l.b16 %v867
          %v887 = vunpack.c.h.b16 %v867
          %v888 = vunpack.c.l.b16 %v868
          %v889 = vunpack.c.h.b16 %v868
          %v890 = vunpack.c.l.b16 %v869
          %v891 = vunpack.c.h.b16 %v869
          %v892 = vunpack.c.l.b16 %v870
          %v893 = vunpack.c.h.b16 %v870
          %v894 = vunpack.c.l.b16 %v871
          %v895 = vunpack.c.h.b16 %v871
          %v896 = vpack.c.b16 %v880, %v880
          %v897 = vpack.c.b16 %v881, %v881
          %v898 = vpack.c.b16 %v882, %v882
          %v899 = vpack.c.b16 %v883, %v883
          %v900 = vpack.c.b16 %v884, %v884
          %v901 = vpack.c.b16 %v885, %v885
          %v902 = vpack.c.b16 %v886, %v886
          %v903 = vpack.c.b16 %v887, %v887
          %v904 = vpack.c.b16 %v888, %v888
          %v905 = vpack.c.b16 %v889, %v889
          %v906 = vpack.c.b16 %v890, %v890
          %v907 = vpack.c.b16 %v891, %v891
          %v908 = vpack.c.b16 %v892, %v892
          %v909 = vpack.c.b16 %v893, %v893
          %v910 = vpack.c.b16 %v894, %v894
          %v911 = vpack.c.b16 %v895, %v895
          %928 = vst [vmem:[%s330] sm:$0xf] %v896
          %929 = vst [vmem:[%s330 + $0x4] sm:$0xf] %v897
          %930 = vst [vmem:[%s330 + $0x8] sm:$0xf] %v898
          %931 = vst [vmem:[%s330 + $0xc] sm:$0xf] %v899
          %932 = vst [vmem:[%s330 + $0x10] sm:$0xf] %v900
          %933 = vst [vmem:[%s330 + $0x14] sm:$0xf] %v901
          %934 = vst [vmem:[%s330 + $0x18] sm:$0xf] %v902
          %935 = vst [vmem:[%s330 + $0x1c] sm:$0xf] %v903
          %936 = vst [vmem:[%s330 + $0x20] sm:$0xf] %v904
          %937 = vst [vmem:[%s330 + $0x24] sm:$0xf] %v905
          %938 = vst [vmem:[%s330 + $0x28] sm:$0xf] %v906
          %939 = vst [vmem:[%s330 + $0x2c] sm:$0xf] %v907
          %940 = vst [vmem:[%s330 + $0x30] sm:$0xf] %v908
          %941 = vst [vmem:[%s330 + $0x34] sm:$0xf] %v909
          %942 = vst [vmem:[%s330 + $0x38] sm:$0xf] %v910
          %943 = vst [vmem:[%s330 + $0x3c] sm:$0xf] %v911
        $region56: #{rgcn_forward.3} parent=35 // pred_fallthru
          _
        %s944 = smul.u32 16, %s26
        %p945 = scmp.lt.s32.totalorder %s944, 31
        %s946 = scalar_select %p945, %s944, 31
        %s947 = smul.addr %s946, 4
        %s948 = scalar_lea.vmem %s4, %s947
        // Predicated region
        $region57: #{rgcn_forward.3} parent=35 // pred_check
          %p949 = pneg %p163
        $region58: #{rgcn_forward.3} parent=35 // pred_check_branch
          %951 = sbr.rel (%p949) target = $region60
        $region59: #{rgcn_forward.3} parent=35 // pred_region
          %s952 = smul.u32 16, %s26
        $region60: #{rgcn_forward.3} parent=35 // pred_fallthru
          _
      $region36: #{rgcn_forward.3} parent=5 // pred_fallthru
        _
      %p953 = scmp.le.s32.totalorder 2, %s16
      // Predicated region
      $region61: #{rgcn_forward.3} parent=5 // pred_check
        %p954 = pneg %p953
      $region62: #{rgcn_forward.3} parent=5 // pred_check_branch
        %956 = sbr.rel (%p954) target = $region64
      $region63: #{rgcn_forward.3} parent=5 // pred_region
        %s957 = ssub.s32 %s16, 2
        // Predicated region
        $region65: #{rgcn_forward.3} parent=63 // pred_check
          %p958 = pneg %p169
        $region66: #{rgcn_forward.3} parent=63 // pred_check_branch
          %960 = sbr.rel (%p958) target = $region68
        $region67: #{rgcn_forward.3} parent=63 // pred_region
          %s961 = smul.u32 16, %s29
          %p962 = scmp.lt.s32.totalorder %s961, 31
          %s963 = scalar_select %p962, %s961, 31
          %s964 = smul.addr %s963, 4
          %s965 = scalar_lea.vmem %s4, %s964
        $region68: #{rgcn_forward.3} parent=63 // pred_fallthru
          _
      $region64: #{rgcn_forward.3} parent=5 // pred_fallthru
        _
    $region6: #{rgcn_forward.3} parent=1 // loop_footer
      %s20 = sadd.s32 1, %s16
    $region7: #{rgcn_forward.3} parent=1 // loop_footer_branch
      %15 = sbr.rel target = $region3
    $region8: #{rgcn_forward.3} parent=1 // loop_exit
      _
    %966 = vsyncpa [#allocation4], 1
    %s967 = scalar_lea.sflag [#allocation4], 1
    %968 = vsyncpa %s967, 1
    %969 = vsyncpa [#allocation6], 1
    %s970 = scalar_lea.sflag [#allocation6], 1
    %971 = vsyncpa %s970, 1

// kernel: rgcn_forward.5
$region0: #{rgcn_forward.5}
  #allocation0 [shape = 'u32[]', space=smem, size = 0x4, offset = 0x4, fixed_abs, tag = 'smem constant byte address 0x4 - core index']
  #allocation1 [shape = 'u32[144,128]{1,0:T(1,128)}', space=vmem, size = 0x12000, scoped, tag = 'internal scratch']
  #allocation2 [shape = 'f32[128,128]{1,0:T(8,128)}', space=vmem, size = 0x10000, scoped, tag = 'scratch operand']
  %s0 = inlined_call_operand.vmem [shape: bf16[3,256,256], index: 0, kind: input, shape index: {}]
  %s1 = inlined_call_operand.vmem [shape: bf16[3,256,128], index: 1, kind: input, shape index: {}]
  %s2 = inlined_call_operand.vmem [shape: bf16[256,128], index: 2, kind: input, shape index: {}]
  %s3 = inlined_call_operand.vmem [shape: f32[1,128], index: 3, kind: input, shape index: {}]
  %s4 = inlined_call_operand.hbm [shape: f32[256,128], index: 4, kind: output, shape index: {}]
  %s5 = sld [smem:[#allocation0]]
  $region57: #{rgcn_forward.5} parent=0
    _
  %s7 = ssub.s32 1, %s5
  %s8 = scalar_select 0, %s7, %s5
  $region1: #{rgcn_forward.5} parent=0
    #allocation3 [shape = 'u8[131072]{0}', space=vmem, size = 0x20000, scoped, tag = 'output window, operand 0']
    #allocation4 [shape = 's32[2]{0}', space=sflag, size = 0x8, scoped, tag = 'scoped memory for rgcn_forward.5']
    %9 = vsyncpa [#allocation4], 0
    %s10 = scalar_lea.sflag [#allocation4], 1
    %11 = vsyncpa %s10, 0
    loop: start=0, step=1, limit=8
    $region2: #{rgcn_forward.5} parent=1 // loop_pre_header
      _
    $region3: #{rgcn_forward.5} parent=1 // loop_header
      %s13 = sphi 0, %s17
      %p14 = scmp.ge.s32.totalorder %s13, 8
      %s20 = sphi 0, %s39
      %s21 = sphi 0, %s35
      %s22 = sphi 0, %s31
      %s23 = sphi 0, %s20
      %s24 = sphi 0, %s21
      %s25 = sphi 0, %s22
      %s26 = sphi 0, %s23
      %s27 = sphi 0, %s24
      %s28 = sphi 0, %s25
      %s46 = sphi 0, %s48
      %s49 = sphi 0, %s46
      %s50 = sphi 0, %s49
      %s66 = sphi 0, %s50
      %s74 = sphi 0, %s76
      %s77 = sphi 0, %s74
      %s78 = sphi 0, %s77
      %s94 = sphi 0, %s78
      %s100 = sphi 0, %s102
      %s103 = sphi 0, %s100
      %s104 = sphi 0, %s103
      %s120 = sphi 0, %s104
      %s124 = sphi 0, %s124
      %s126 = sphi 0, %s124
      %s127 = sphi 0, %s126
      %s141 = sphi 0, %s127
      %s147 = sphi 0, %s149
      %s150 = sphi 0, %s147
      %s151 = sphi 0, %s150
      %s167 = sphi 0, %s151
    $region4: #{rgcn_forward.5} parent=1 // loop_header_branch
      %16 = sbr.rel (%p14) target = $region8
    $region5: #{rgcn_forward.5} parent=1 // loop_body
      %s18 = ssub.s32 %s13, 1
      %s19 = ssub.s32 %s13, 2
      %s29 = sadd.s32 1, %s22
      %p30 = scmp.ge.s32.totalorder %s29, 1
      %s31 = scalar_select %p30, 0, %s29
      %s32 = sadd.s32 1, %s21
      %s33 = scalar_select %p30, %s32, %s21
      %p34 = scmp.ge.s32.totalorder %s33, 3
      %s35 = scalar_select %p34, 0, %s33
      %s36 = sadd.s32 1, %s20
      %s37 = scalar_select %p34, %s36, %s20
      %p38 = scmp.ge.s32.totalorder %s37, 2
      %s39 = scalar_select %p38, 0, %s37
      %s40 = ssub.s32 %s21, %s35
      %s41 = ssub.s32 %s20, %s39
      %s42 = sor.u32 %s40, %s41
      %s43 = ssub.s32 %s22, %s31
      %s44 = sor.u32 %s42, %s43
      %p45 = scmp.eq.s32.totalorder %s44, 0
      %s47 = sadd.s32 %s46, 1
      %s48 = scalar_select %p45, %s46, %s47
      %p51 = pneg %p45
      %p52 = scmp.eq.s32.totalorder %s13, 5
      %p53 = por %p51, %p52
      %p54 = scmp.ne.s32.totalorder %s46, %s49
      %p55 = scmp.eq.s32.totalorder %s13, 0
      %p56 = por %p54, %p55
      %p57 = scmp.ne.s32.totalorder %s46, %s49
      %p58 = scmp.eq.s32.totalorder %s18, 5
      %p59 = por %p57, %p58
      %p60 = scmp.ne.s32.totalorder %s49, %s50
      %p61 = scmp.eq.s32.totalorder %s18, 0
      %p62 = por %p60, %p61
      %p63 = scmp.ne.s32.totalorder %s49, %s50
      %p64 = scmp.eq.s32.totalorder %s19, 5
      %p65 = por %p63, %p64
      %p67 = scmp.ne.s32.totalorder %s50, %s66
      %p68 = scmp.eq.s32.totalorder %s19, 0
      %p69 = por %p67, %p68
      %s70 = ssub.s32 %s21, %s35
      %s71 = ssub.s32 %s22, %s31
      %s72 = sor.u32 %s70, %s71
      %p73 = scmp.eq.s32.totalorder %s72, 0
      %s75 = sadd.s32 %s74, 1
      %s76 = scalar_select %p73, %s74, %s75
      %p79 = pneg %p73
      %p80 = scmp.eq.s32.totalorder %s13, 5
      %p81 = por %p79, %p80
      %p82 = scmp.ne.s32.totalorder %s74, %s77
      %p83 = scmp.eq.s32.totalorder %s13, 0
      %p84 = por %p82, %p83
      %p85 = scmp.ne.s32.totalorder %s74, %s77
      %p86 = scmp.eq.s32.totalorder %s18, 5
      %p87 = por %p85, %p86
      %p88 = scmp.ne.s32.totalorder %s77, %s78
      %p89 = scmp.eq.s32.totalorder %s18, 0
      %p90 = por %p88, %p89
      %p91 = scmp.ne.s32.totalorder %s77, %s78
      %p92 = scmp.eq.s32.totalorder %s19, 5
      %p93 = por %p91, %p92
      %p95 = scmp.ne.s32.totalorder %s78, %s94
      %p96 = scmp.eq.s32.totalorder %s19, 0
      %p97 = por %p95, %p96
      %s98 = ssub.s32 %s20, %s39
      %p99 = scmp.eq.s32.totalorder %s98, 0
      %s101 = sadd.s32 %s100, 1
      %s102 = scalar_select %p99, %s100, %s101
      %p105 = pneg %p99
      %p106 = scmp.eq.s32.totalorder %s13, 5
      %p107 = por %p105, %p106
      %p108 = scmp.ne.s32.totalorder %s100, %s103
      %p109 = scmp.eq.s32.totalorder %s13, 0
      %p110 = por %p108, %p109
      %p111 = scmp.ne.s32.totalorder %s100, %s103
      %p112 = scmp.eq.s32.totalorder %s18, 5
      %p113 = por %p111, %p112
      %p114 = scmp.ne.s32.totalorder %s103, %s104
      %p115 = scmp.eq.s32.totalorder %s18, 0
      %p116 = por %p114, %p115
      %p117 = scmp.ne.s32.totalorder %s103, %s104
      %p118 = scmp.eq.s32.totalorder %s19, 5
      %p119 = por %p117, %p118
      %p121 = scmp.ne.s32.totalorder %s104, %s120
      %p122 = scmp.eq.s32.totalorder %s19, 0
      %p123 = por %p121, %p122
      %s125 = sadd.s32 %s124, 1
      %p128 = scmp.eq.s32.totalorder %s13, 5
      %p129 = scmp.ne.s32.totalorder %s124, %s126
      %p130 = scmp.eq.s32.totalorder %s13, 0
      %p131 = por %p129, %p130
      %p132 = scmp.ne.s32.totalorder %s124, %s126
      %p133 = scmp.eq.s32.totalorder %s18, 5
      %p134 = por %p132, %p133
      %p135 = scmp.ne.s32.totalorder %s126, %s127
      %p136 = scmp.eq.s32.totalorder %s18, 0
      %p137 = por %p135, %p136
      %p138 = scmp.ne.s32.totalorder %s126, %s127
      %p139 = scmp.eq.s32.totalorder %s19, 5
      %p140 = por %p138, %p139
      %p142 = scmp.ne.s32.totalorder %s127, %s141
      %p143 = scmp.eq.s32.totalorder %s19, 0
      %p144 = por %p142, %p143
      %s145 = ssub.s32 %s20, %s39
      %p146 = scmp.eq.s32.totalorder %s145, 0
      %s148 = sadd.s32 %s147, 1
      %s149 = scalar_select %p146, %s147, %s148
      %p152 = pneg %p146
      %p153 = scmp.eq.s32.totalorder %s13, 5
      %p154 = por %p152, %p153
      %p155 = scmp.ne.s32.totalorder %s147, %s150
      %p156 = scmp.eq.s32.totalorder %s13, 0
      %p157 = por %p155, %p156
      %p158 = scmp.ne.s32.totalorder %s147, %s150
      %p159 = scmp.eq.s32.totalorder %s18, 5
      %p160 = por %p158, %p159
      %p161 = scmp.ne.s32.totalorder %s150, %s151
      %p162 = scmp.eq.s32.totalorder %s18, 0
      %p163 = por %p161, %p162
      %p164 = scmp.ne.s32.totalorder %s150, %s151
      %p165 = scmp.eq.s32.totalorder %s19, 5
      %p166 = por %p164, %p165
      %p168 = scmp.ne.s32.totalorder %s151, %s167
      %p169 = scmp.eq.s32.totalorder %s19, 0
      %p170 = por %p168, %p169
      %p171 = scmp.le.s32.totalorder 1, %s13
      %p172 = scmp.lt.s32.totalorder %s13, 7
      %p173 = pnand %p171, %p172
      %p174 = pneg %p173
      // Predicated region
      $region9: #{rgcn_forward.5} parent=5 // pred_check
        _
      $region10: #{rgcn_forward.5} parent=5 // pred_check_branch
        %176 = sbr.rel (%p173) target = $region12
      $region11: #{rgcn_forward.5} parent=5 // pred_region
        %s177 = ssub.s32 %s13, 1
        // Predicated region
        $region13: #{rgcn_forward.5} parent=11 // pred_check
          %p178 = pneg %p137
        $region14: #{rgcn_forward.5} parent=11 // pred_check_branch
          %180 = sbr.rel (%p178) target = $region16
        $region15: #{rgcn_forward.5} parent=11 // pred_region
          _
        $region16: #{rgcn_forward.5} parent=11 // pred_fallthru
          _
      $region12: #{rgcn_forward.5} parent=5 // pred_fallthru
        _
      %p181 = scmp.lt.s32.totalorder %s13, 6
      // Predicated region
      $region17: #{rgcn_forward.5} parent=5 // pred_check
        %p182 = pneg %p181
      $region18: #{rgcn_forward.5} parent=5 // pred_check_branch
        %184 = sbr.rel (%p182) target = $region20
      $region19: #{rgcn_forward.5} parent=5 // pred_region
        // Predicated region
        $region21: #{rgcn_forward.5} parent=19 // pred_check
          %p185 = pneg %p56
        $region22: #{rgcn_forward.5} parent=19 // pred_check_branch
          %187 = sbr.rel (%p185) target = $region24
        $region23: #{rgcn_forward.5} parent=19 // pred_region
          %s188 = smul.u32 16, %s20
          %s189 = smul.u32 2, %s22
          %p190 = scmp.lt.s32.totalorder %s21, 2
          %s191 = scalar_select %p190, %s21, 2
          %p192 = scmp.lt.s32.totalorder %s188, 31
          %s193 = scalar_select %p192, %s188, 31
          %p194 = scmp.lt.s32.totalorder %s189, 1
          %s195 = scalar_select %p194, %s189, 1
          %s196 = smul.addr %s193, 2
          %s197 = sadd.s32 %s195, %s196
          %s198 = smul.addr %s191, 64
          %s199 = sadd.s32 %s197, %s198
          %s200 = smul.addr %s199, 4
          %s201 = scalar_lea.vmem %s0, %s200
          %s202 = smul.u32 16, %s20
          %s203 = smul.u32 2, %s22
        $region24: #{rgcn_forward.5} parent=19 // pred_fallthru
          _
        // Predicated region
        $region25: #{rgcn_forward.5} parent=19 // pred_check
          %p204 = pneg %p84
        $region26: #{rgcn_forward.5} parent=19 // pred_check_branch
          %206 = sbr.rel (%p204) target = $region28
        $region27: #{rgcn_forward.5} parent=19 // pred_region
          %s207 = smul.u32 32, %s22
          %p208 = scmp.lt.s32.totalorder %s21, 2
          %s209 = scalar_select %p208, %s21, 2
          %p210 = scmp.lt.s32.totalorder %s207, 31
          %s211 = scalar_select %p210, %s207, 31
          %s212 = smul.addr %s209, 32
          %s213 = sadd.s32 %s211, %s212
          %s214 = smul.addr %s213, 4
          %s215 = scalar_lea.vmem %s1, %s214
          %s216 = smul.u32 32, %s22
        $region28: #{rgcn_forward.5} parent=19 // pred_fallthru
          _
        // Predicated region
        $region29: #{rgcn_forward.5} parent=19 // pred_check
          %p217 = pneg %p110
        $region30: #{rgcn_forward.5} parent=19 // pred_check_branch
          %219 = sbr.rel (%p217) target = $region32
        $region31: #{rgcn_forward.5} parent=19 // pred_region
          %s220 = smul.u32 16, %s20
          %p221 = scmp.lt.s32.totalorder %s220, 31
          %s222 = scalar_select %p221, %s220, 31
          %s223 = smul.addr %s222, 4
          %s224 = scalar_lea.vmem %s2, %s223
          %s225 = smul.u32 16, %s20
        $region32: #{rgcn_forward.5} parent=19 // pred_fallthru
          _
      $region20: #{rgcn_forward.5} parent=5 // pred_fallthru
        _
      %p226 = scmp.le.s32.totalorder 1, %s13
      %p227 = scmp.lt.s32.totalorder %s13, 7
      %p228 = pnand %p226, %p227
      %p229 = pneg %p228
      // Predicated region
      $region33: #{rgcn_forward.5} parent=5 // pred_check
        _
      $region34: #{rgcn_forward.5} parent=5 // pred_check_branch
        %231 = sbr.rel (%p228) target = $region36
      $region35: #{rgcn_forward.5} parent=5 // pred_region
        %s232 = ssub.s32 %s13, 1
        %s233 = smul.u32 16, %s23
        %s234 = smul.u32 2, %s25
        %p235 = scmp.lt.s32.totalorder %s24, 2
        %s236 = scalar_select %p235, %s24, 2
        %p237 = scmp.lt.s32.totalorder %s233, 31
        %s238 = scalar_select %p237, %s233, 31
        %p239 = scmp.lt.s32.totalorder %s234, 1
        %s240 = scalar_select %p239, %s234, 1
        %s241 = smul.addr %s238, 2
        %s242 = sadd.s32 %s240, %s241
        %s243 = smul.addr %s236, 64
        %s244 = sadd.s32 %s242, %s243
        %s245 = smul.addr %s244, 4
        %s246 = scalar_lea.vmem %s0, %s245
        %p247 = pneg %p62
        %p248 = pneg %p59
        %s249 = smul.u32 32, %s25
        %p250 = scmp.lt.s32.totalorder %s24, 2
        %s251 = scalar_select %p250, %s24, 2
        %p252 = scmp.lt.s32.totalorder %s249, 31
        %s253 = scalar_select %p252, %s249, 31
        %s254 = smul.addr %s251, 32
        %s255 = sadd.s32 %s253, %s254
        %s256 = smul.addr %s255, 4
        %s257 = scalar_lea.vmem %s1, %s256
        %p258 = pneg %p90
        %p259 = pneg %p87
        %s260 = smul.u32 16, %s23
        %p261 = scmp.lt.s32.totalorder %s260, 31
        %s262 = scalar_select %p261, %s260, 31
        %s263 = smul.addr %s262, 4
        %s264 = scalar_lea.vmem %s2, %s263
        %p265 = pneg %p116
        %p266 = pneg %p113
        %p267 = pneg %p137
        %p268 = pneg %p134
        %p269 = pneg %p163
        %p270 = pneg %p160
        %s271 = sand.u32 %s150, 1
        %s272 = scalar_lea.sflag [#allocation4], %s271
        %s273 = sand.u32 %s150, 1
        %s274 = smul.addr %s273, 128
        %s275 = scalar_lea.vmem [#allocation3], %s274
        %s276 = smul.u32 16, %s23
        %s277 = smul.u32 2, %s25
        %p278 = scmp.lt.s32.totalorder %s24, 2
        %s279 = scalar_select %p278, %s24, 2
        %p280 = scmp.lt.s32.totalorder %s276, 31
        %s281 = scalar_select %p280, %s276, 31
        %p282 = scmp.lt.s32.totalorder %s277, 1
        %s283 = scalar_select %p282, %s277, 1
        %s284 = smul.addr %s281, 2
        %s285 = sadd.s32 %s283, %s284
        %s286 = smul.addr %s279, 64
        %s287 = sadd.s32 %s285, %s286
        %s288 = smul.addr %s287, 4
        %s289 = scalar_lea.vmem %s0, %s288
        %s290 = smul.u32 16, %s23
        %s291 = smul.u32 2, %s25
        %s292 = smul.u32 32, %s25
        %p293 = scmp.lt.s32.totalorder %s24, 2
        %s294 = scalar_select %p293, %s24, 2
        %p295 = scmp.lt.s32.totalorder %s292, 31
        %s296 = scalar_select %p295, %s292, 31
        %s297 = smul.addr %s294, 32
        %s298 = sadd.s32 %s296, %s297
        %s299 = smul.addr %s298, 4
        %s300 = scalar_lea.vmem %s1, %s299
        %s301 = smul.u32 32, %s25
        %s302 = smul.u32 16, %s23
        %p303 = scmp.lt.s32.totalorder %s302, 31
        %s304 = scalar_select %p303, %s302, 31
        %s305 = smul.addr %s304, 4
        %s306 = scalar_lea.vmem %s2, %s305
        %s307 = smul.u32 16, %s23
        %s308 = smul.u32 16, %s23
        %p310 = scmp.eq.s32.totalorder %s24, 0
        %p311 = scmp.eq.s32.totalorder %s25, 0
        %p312 = pnand %p310, %p311
        %p313 = pneg %p312
        // Predicated region
        $region37: #{rgcn_forward.5} parent=35 // pred_check
          _
        $region38: #{rgcn_forward.5} parent=35 // pred_check_branch
          %315 = sbr.rel (%p312) target = $region40
        $region39: #{rgcn_forward.5} parent=35 // pred_region
          %316 = vst [vmem:[#allocation2] sm:$0xff] 0.0
          %317 = vst [vmem:[#allocation2 + $0x8] sm:$0xff] 0.0
          %318 = vst [vmem:[#allocation2 + $0x10] sm:$0xff] 0.0
          %319 = vst [vmem:[#allocation2 + $0x18] sm:$0xff] 0.0
          %320 = vst [vmem:[#allocation2 + $0x20] sm:$0xff] 0.0
          %321 = vst [vmem:[#allocation2 + $0x28] sm:$0xff] 0.0
          %322 = vst [vmem:[#allocation2 + $0x30] sm:$0xff] 0.0
          %323 = vst [vmem:[#allocation2 + $0x38] sm:$0xff] 0.0
          %324 = vst [vmem:[#allocation2 + $0x40] sm:$0xff] 0.0
          %325 = vst [vmem:[#allocation2 + $0x48] sm:$0xff] 0.0
          %326 = vst [vmem:[#allocation2 + $0x50] sm:$0xff] 0.0
          %327 = vst [vmem:[#allocation2 + $0x58] sm:$0xff] 0.0
          %328 = vst [vmem:[#allocation2 + $0x60] sm:$0xff] 0.0
          %329 = vst [vmem:[#allocation2 + $0x68] sm:$0xff] 0.0
          %330 = vst [vmem:[#allocation2 + $0x70] sm:$0xff] 0.0
          %331 = vst [vmem:[#allocation2 + $0x78] sm:$0xff] 0.0
        $region40: #{rgcn_forward.5} parent=35 // pred_fallthru
          _
        %v332 = vld [vmem:[#allocation2] sm:$0xff]
        %v333 = vld [vmem:[#allocation2 + $0x8] sm:$0xff]
        %v334 = vld [vmem:[#allocation2 + $0x10] sm:$0xff]
        %v335 = vld [vmem:[#allocation2 + $0x18] sm:$0xff]
        %v336 = vld [vmem:[#allocation2 + $0x20] sm:$0xff]
        %v337 = vld [vmem:[#allocation2 + $0x28] sm:$0xff]
        %v338 = vld [vmem:[#allocation2 + $0x30] sm:$0xff]
        %v339 = vld [vmem:[#allocation2 + $0x38] sm:$0xff]
        %v340 = vld [vmem:[#allocation2 + $0x40] sm:$0xff]
        %v341 = vld [vmem:[#allocation2 + $0x48] sm:$0xff]
        %v342 = vld [vmem:[#allocation2 + $0x50] sm:$0xff]
        %v343 = vld [vmem:[#allocation2 + $0x58] sm:$0xff]
        %v344 = vld [vmem:[#allocation2 + $0x60] sm:$0xff]
        %v345 = vld [vmem:[#allocation2 + $0x68] sm:$0xff]
        %v346 = vld [vmem:[#allocation2 + $0x70] sm:$0xff]
        %v347 = vld [vmem:[#allocation2 + $0x78] sm:$0xff]
        %v348 = vld [vmem:[%s289] sm:$0xff]
        %v349 = vld [vmem:[%s289 + $0x8] sm:$0xff]
        %v350 = vld [vmem:[%s289 + $0x10] sm:$0xff]
        %v351 = vld [vmem:[%s289 + $0x18] sm:$0xff]
        %v352 = vld [vmem:[%s289 + $0x20] sm:$0xff]
        %v353 = vld [vmem:[%s289 + $0x28] sm:$0xff]
        %v354 = vld [vmem:[%s289 + $0x30] sm:$0xff]
        %v355 = vld [vmem:[%s289 + $0x38] sm:$0xff]
        %v356 = vld [vmem:[%s289 + $0x40] sm:$0xff]
        %v357 = vld [vmem:[%s289 + $0x48] sm:$0xff]
        %v358 = vld [vmem:[%s289 + $0x50] sm:$0xff]
        %v359 = vld [vmem:[%s289 + $0x58] sm:$0xff]
        %v360 = vld [vmem:[%s289 + $0x60] sm:$0xff]
        %v361 = vld [vmem:[%s289 + $0x68] sm:$0xff]
        %v362 = vld [vmem:[%s289 + $0x70] sm:$0xff]
        %v363 = vld [vmem:[%s289 + $0x78] sm:$0xff]
        %v364 = vld [vmem:[%s300] sm:$0xf]
        %v365 = vld [vmem:[%s300 + $0x4] sm:$0xf]
        %v366 = vld [vmem:[%s300 + $0x8] sm:$0xf]
        %v367 = vld [vmem:[%s300 + $0xc] sm:$0xf]
        %v368 = vld [vmem:[%s300 + $0x10] sm:$0xf]
        %v369 = vld [vmem:[%s300 + $0x14] sm:$0xf]
        %v370 = vld [vmem:[%s300 + $0x18] sm:$0xf]
        %v371 = vld [vmem:[%s300 + $0x1c] sm:$0xf]
        %v372 = vld [vmem:[%s300 + $0x20] sm:$0xf]
        %v373 = vld [vmem:[%s300 + $0x24] sm:$0xf]
        %v374 = vld [vmem:[%s300 + $0x28] sm:$0xf]
        %v375 = vld [vmem:[%s300 + $0x2c] sm:$0xf]
        %v376 = vld [vmem:[%s300 + $0x30] sm:$0xf]
        %v377 = vld [vmem:[%s300 + $0x34] sm:$0xf]
        %v378 = vld [vmem:[%s300 + $0x38] sm:$0xf]
        %v379 = vld [vmem:[%s300 + $0x3c] sm:$0xf]
        %v380 = vld [vmem:[%s300 + $0x40] sm:$0xf]
        %v381 = vld [vmem:[%s300 + $0x44] sm:$0xf]
        %v382 = vld [vmem:[%s300 + $0x48] sm:$0xf]
        %v383 = vld [vmem:[%s300 + $0x4c] sm:$0xf]
        %v384 = vld [vmem:[%s300 + $0x50] sm:$0xf]
        %v385 = vld [vmem:[%s300 + $0x54] sm:$0xf]
        %v386 = vld [vmem:[%s300 + $0x58] sm:$0xf]
        %v387 = vld [vmem:[%s300 + $0x5c] sm:$0xf]
        %v388 = vld [vmem:[%s300 + $0x60] sm:$0xf]
        %v389 = vld [vmem:[%s300 + $0x64] sm:$0xf]
        %v390 = vld [vmem:[%s300 + $0x68] sm:$0xf]
        %v391 = vld [vmem:[%s300 + $0x6c] sm:$0xf]
        %v392 = vld [vmem:[%s300 + $0x70] sm:$0xf]
        %v393 = vld [vmem:[%s300 + $0x74] sm:$0xf]
        %v394 = vld [vmem:[%s300 + $0x78] sm:$0xf]
        %v395 = vld [vmem:[%s300 + $0x7c] sm:$0xf]
        %v412 = vunpack.c.l.b16 %v348
        %v413 = vunpack.c.h.b16 %v348
        %v414 = vunpack.c.l.b16 %v349
        %v415 = vunpack.c.h.b16 %v349
        %v416 = vunpack.c.l.b16 %v350
        %v417 = vunpack.c.h.b16 %v350
        %v418 = vunpack.c.l.b16 %v351
        %v419 = vunpack.c.h.b16 %v351
        %v420 = vunpack.c.l.b16 %v352
        %v421 = vunpack.c.h.b16 %v352
        %v422 = vunpack.c.l.b16 %v353
        %v423 = vunpack.c.h.b16 %v353
        %v424 = vunpack.c.l.b16 %v354
        %v425 = vunpack.c.h.b16 %v354
        %v426 = vunpack.c.l.b16 %v355
        %v427 = vunpack.c.h.b16 %v355
        %v428 = vunpack.c.l.b16 %v356
        %v429 = vunpack.c.h.b16 %v356
        %v430 = vunpack.c.l.b16 %v357
        %v431 = vunpack.c.h.b16 %v357
        %v432 = vunpack.c.l.b16 %v358
        %v433 = vunpack.c.h.b16 %v358
        %v434 = vunpack.c.l.b16 %v359
        %v435 = vunpack.c.h.b16 %v359
        %v436 = vunpack.c.l.b16 %v360
        %v437 = vunpack.c.h.b16 %v360
        %v438 = vunpack.c.l.b16 %v361
        %v439 = vunpack.c.h.b16 %v361
        %v440 = vunpack.c.l.b16 %v362
        %v441 = vunpack.c.h.b16 %v362
        %v442 = vunpack.c.l.b16 %v363
        %v443 = vunpack.c.h.b16 %v363
        %v444 = vpack.c.b16 %v414, %v412
        %v445 = vpack.c.b16 %v415, %v413
        %v446 = vpack.c.b16 %v418, %v416
        %v447 = vpack.c.b16 %v419, %v417
        %v448 = vpack.c.b16 %v422, %v420
        %v449 = vpack.c.b16 %v423, %v421
        %v450 = vpack.c.b16 %v426, %v424
        %v451 = vpack.c.b16 %v427, %v425
        %v452 = vpack.c.b16 %v430, %v428
        %v453 = vpack.c.b16 %v431, %v429
        %v454 = vpack.c.b16 %v434, %v432
        %v455 = vpack.c.b16 %v435, %v433
        %v456 = vpack.c.b16 %v438, %v436
        %v457 = vpack.c.b16 %v439, %v437
        %v458 = vpack.c.b16 %v442, %v440
        %v459 = vpack.c.b16 %v443, %v441
        %v508 = vunpack.c.l.b16 %v364
        %v509 = vunpack.c.l.b16 %v365
        %v510 = vunpack.c.l.b16 %v366
        %v511 = vunpack.c.l.b16 %v367
        %v512 = vunpack.c.l.b16 %v368
        %v513 = vunpack.c.l.b16 %v369
        %v514 = vunpack.c.l.b16 %v370
        %v515 = vunpack.c.l.b16 %v371
        %v516 = vunpack.c.l.b16 %v372
        %v517 = vunpack.c.l.b16 %v373
        %v518 = vunpack.c.l.b16 %v374
        %v519 = vunpack.c.l.b16 %v375
        %v520 = vunpack.c.l.b16 %v376
        %v521 = vunpack.c.l.b16 %v377
        %v522 = vunpack.c.l.b16 %v378
        %v523 = vunpack.c.l.b16 %v379
        %v524 = vunpack.c.l.b16 %v380
        %v525 = vunpack.c.l.b16 %v381
        %v526 = vunpack.c.l.b16 %v382
        %v527 = vunpack.c.l.b16 %v383
        %v528 = vunpack.c.l.b16 %v384
        %v529 = vunpack.c.l.b16 %v385
        %v530 = vunpack.c.l.b16 %v386
        %v531 = vunpack.c.l.b16 %v387
        %v532 = vunpack.c.l.b16 %v388
        %v533 = vunpack.c.l.b16 %v389
        %v534 = vunpack.c.l.b16 %v390
        %v535 = vunpack.c.l.b16 %v391
        %v536 = vunpack.c.l.b16 %v392
        %v537 = vunpack.c.l.b16 %v393
        %v538 = vunpack.c.l.b16 %v394
        %v539 = vunpack.c.l.b16 %v395
        %v540 = vpack.c.b16 %v509, %v508
        %v541 = vpack.c.b16 %v511, %v510
        %v542 = vpack.c.b16 %v513, %v512
        %v543 = vpack.c.b16 %v515, %v514
        %v544 = vpack.c.b16 %v517, %v516
        %v545 = vpack.c.b16 %v519, %v518
        %v546 = vpack.c.b16 %v521, %v520
        %v547 = vpack.c.b16 %v523, %v522
        %v548 = vpack.c.b16 %v525, %v524
        %v549 = vpack.c.b16 %v527, %v526
        %v550 = vpack.c.b16 %v529, %v528
        %v551 = vpack.c.b16 %v531, %v530
        %v552 = vpack.c.b16 %v533, %v532
        %v553 = vpack.c.b16 %v535, %v534
        %v554 = vpack.c.b16 %v537, %v536
        %v555 = vpack.c.b16 %v539, %v538
        %572 = vmatprep.subr.bf16.mxu0 0
        %573 = vmatpush1.bf16.msra.mxu0 %v540
        %574 = vmatprep.subr.bf16.mxu0 0
        %575 = vmatpush1.bf16.msra.mxu0 %v541
        %576 = vmatprep.subr.bf16.mxu0 0
        %577 = vmatpush1.bf16.msra.mxu0 %v542
        %578 = vmatprep.subr.bf16.mxu0 0
        %579 = vmatpush1.bf16.msra.mxu0 %v543
        %580 = vmatprep.subr.bf16.mxu0 0
        %581 = vmatpush1.bf16.msra.mxu0 %v544
        %582 = vmatprep.subr.bf16.mxu0 0
        %583 = vmatpush1.bf16.msra.mxu0 %v545
        %584 = vmatprep.subr.bf16.mxu0 0
        %585 = vmatpush1.bf16.msra.mxu0 %v546
        %586 = vmatprep.subr.bf16.mxu0 0
        %587 = vmatpush1.bf16.msra.mxu0 %v547
        %588 = vmatprep.subr.bf16.mxu0 0
        %589 = vmatpush1.bf16.msra.mxu0 %v548
        %590 = vmatprep.subr.bf16.mxu0 0
        %591 = vmatpush1.bf16.msra.mxu0 %v549
        %592 = vmatprep.subr.bf16.mxu0 0
        %593 = vmatpush1.bf16.msra.mxu0 %v550
        %594 = vmatprep.subr.bf16.mxu0 0
        %595 = vmatpush1.bf16.msra.mxu0 %v551
        %596 = vmatprep.subr.bf16.mxu0 0
        %597 = vmatpush1.bf16.msra.mxu0 %v552
        %598 = vmatprep.subr.bf16.mxu0 0
        %599 = vmatpush1.bf16.msra.mxu0 %v553
        %600 = vmatprep.subr.bf16.mxu0 0
        %601 = vmatpush1.bf16.msra.mxu0 %v554
        %602 = vmatprep.subr.bf16.mxu0 0
        %603 = vmatpush1.bf16.msra.mxu0 %v555
        %604 = vmatprep.mubr.bf16.mxu0 %v445
        %605 = vmatmul.mubr.bf16.gmra.mrb[0].mxu0 %v444
        %v606 = vpop.f32.mrb[0].mxu0
        %v607 = vadd.f32 0.0, %v606
        %v608 = vpop.f32.mrb[0].mxu0
        %v609 = vpop.f32.mrb[0].mxu0
        %v610 = vadd.f32 0.0, %v609
        %v611 = vpop.f32.mrb[0].mxu0
        %612 = vmatprep.mubr.bf16.mxu0 %v447
        %613 = vmatmul.mubr.bf16.gmra.mrb[0].mxu0 %v446
        %v614 = vpop.f32.mrb[0].mxu0
        %v615 = vadd.f32 0.0, %v614
        %v616 = vpop.f32.mrb[0].mxu0
        %v617 = vpop.f32.mrb[0].mxu0
        %v618 = vadd.f32 0.0, %v617
        %v619 = vpop.f32.mrb[0].mxu0
        %620 = vmatprep.mubr.bf16.mxu0 %v449
        %621 = vmatmul.mubr.bf16.gmra.mrb[0].mxu0 %v448
        %v622 = vpop.f32.mrb[0].mxu0
        %v623 = vadd.f32 0.0, %v622
        %v624 = vpop.f32.mrb[0].mxu0
        %v625 = vpop.f32.mrb[0].mxu0
        %v626 = vadd.f32 0.0, %v625
        %v627 = vpop.f32.mrb[0].mxu0
        %628 = vmatprep.mubr.bf16.mxu0 %v451
        %629 = vmatmul.mubr.bf16.gmra.mrb[0].mxu0 %v450
        %v630 = vpop.f32.mrb[0].mxu0
        %v631 = vadd.f32 0.0, %v630
        %v632 = vpop.f32.mrb[0].mxu0
        %v633 = vpop.f32.mrb[0].mxu0
        %v634 = vadd.f32 0.0, %v633
        %v635 = vpop.f32.mrb[0].mxu0
        %636 = vmatprep.mubr.bf16.mxu0 %v453
        %637 = vmatmul.mubr.bf16.gmra.mrb[0].mxu0 %v452
        %v638 = vpop.f32.mrb[0].mxu0
        %v639 = vadd.f32 0.0, %v638
        %v640 = vpop.f32.mrb[0].mxu0
        %v641 = vpop.f32.mrb[0].mxu0
        %v642 = vadd.f32 0.0, %v641
        %v643 = vpop.f32.mrb[0].mxu0
        %644 = vmatprep.mubr.bf16.mxu0 %v455
        %645 = vmatmul.mubr.bf16.gmra.mrb[0].mxu0 %v454
        %v646 = vpop.f32.mrb[0].mxu0
        %v647 = vadd.f32 0.0, %v646
        %v648 = vpop.f32.mrb[0].mxu0
        %v649 = vpop.f32.mrb[0].mxu0
        %v650 = vadd.f32 0.0, %v649
        %v651 = vpop.f32.mrb[0].mxu0
        %652 = vmatprep.mubr.bf16.mxu0 %v457
        %653 = vmatmul.mubr.bf16.gmra.mrb[0].mxu0 %v456
        %v654 = vpop.f32.mrb[0].mxu0
        %v655 = vadd.f32 0.0, %v654
        %v656 = vpop.f32.mrb[0].mxu0
        %v657 = vpop.f32.mrb[0].mxu0
        %v658 = vadd.f32 0.0, %v657
        %v659 = vpop.f32.mrb[0].mxu0
        %660 = vmatprep.mubr.bf16.mxu0 %v459
        %661 = vmatmul.mubr.bf16.gmra.mrb[0].mxu0 %v458
        %v662 = vpop.f32.mrb[0].mxu0
        %v663 = vadd.f32 0.0, %v662
        %v664 = vpop.f32.mrb[0].mxu0
        %v665 = vpop.f32.mrb[0].mxu0
        %v666 = vadd.f32 0.0, %v665
        %v667 = vpop.f32.mrb[0].mxu0
        %668 = vdwg.mxu0
        %v669 = vadd.f32 %v332, %v607
        %v670 = vadd.f32 %v333, %v610
        %v671 = vadd.f32 %v334, %v615
        %v672 = vadd.f32 %v335, %v618
        %v673 = vadd.f32 %v336, %v623
        %v674 = vadd.f32 %v337, %v626
        %v675 = vadd.f32 %v338, %v631
        %v676 = vadd.f32 %v339, %v634
        %v677 = vadd.f32 %v340, %v639
        %v678 = vadd.f32 %v341, %v642
        %v679 = vadd.f32 %v342, %v647
        %v680 = vadd.f32 %v343, %v650
        %v681 = vadd.f32 %v344, %v655
        %v682 = vadd.f32 %v345, %v658
        %v683 = vadd.f32 %v346, %v663
        %v684 = vadd.f32 %v347, %v666
        %685 = vst [vmem:[#allocation2] sm:$0xff] %v669
        %686 = vst [vmem:[#allocation2 + $0x8] sm:$0xff] %v670
        %687 = vst [vmem:[#allocation2 + $0x10] sm:$0xff] %v671
        %688 = vst [vmem:[#allocation2 + $0x18] sm:$0xff] %v672
        %689 = vst [vmem:[#allocation2 + $0x20] sm:$0xff] %v673
        %690 = vst [vmem:[#allocation2 + $0x28] sm:$0xff] %v674
        %691 = vst [vmem:[#allocation2 + $0x30] sm:$0xff] %v675
        %692 = vst [vmem:[#allocation2 + $0x38] sm:$0xff] %v676
        %693 = vst [vmem:[#allocation2 + $0x40] sm:$0xff] %v677
        %694 = vst [vmem:[#allocation2 + $0x48] sm:$0xff] %v678
        %695 = vst [vmem:[#allocation2 + $0x50] sm:$0xff] %v679
        %696 = vst [vmem:[#allocation2 + $0x58] sm:$0xff] %v680
        %697 = vst [vmem:[#allocation2 + $0x60] sm:$0xff] %v681
        %698 = vst [vmem:[#allocation2 + $0x68] sm:$0xff] %v682
        %699 = vst [vmem:[#allocation2 + $0x70] sm:$0xff] %v683
        %700 = vst [vmem:[#allocation2 + $0x78] sm:$0xff] %v684
        %p701 = scmp.eq.s32.totalorder %s24, 2
        %p702 = pnand %p701, %p311
        %p703 = pneg %p702
        // Predicated region
        $region41: #{rgcn_forward.5} parent=35 // pred_check
          _
        $region42: #{rgcn_forward.5} parent=35 // pred_check_branch
          %705 = sbr.rel (%p702) target = $region44
        $region43: #{rgcn_forward.5} parent=35 // pred_region
          %v706 = vld [vmem:[#allocation2] sm:$0xff]
          %v707 = vld [vmem:[#allocation2 + $0x8] sm:$0xff]
          %v708 = vld [vmem:[#allocation2 + $0x10] sm:$0xff]
          %v709 = vld [vmem:[#allocation2 + $0x18] sm:$0xff]
          %v710 = vld [vmem:[#allocation2 + $0x20] sm:$0xff]
          %v711 = vld [vmem:[#allocation2 + $0x28] sm:$0xff]
          %v712 = vld [vmem:[#allocation2 + $0x30] sm:$0xff]
          %v713 = vld [vmem:[#allocation2 + $0x38] sm:$0xff]
          %v714 = vld [vmem:[#allocation2 + $0x40] sm:$0xff]
          %v715 = vld [vmem:[#allocation2 + $0x48] sm:$0xff]
          %v716 = vld [vmem:[#allocation2 + $0x50] sm:$0xff]
          %v717 = vld [vmem:[#allocation2 + $0x58] sm:$0xff]
          %v718 = vld [vmem:[#allocation2 + $0x60] sm:$0xff]
          %v719 = vld [vmem:[#allocation2 + $0x68] sm:$0xff]
          %v720 = vld [vmem:[#allocation2 + $0x70] sm:$0xff]
          %v721 = vld [vmem:[#allocation2 + $0x78] sm:$0xff]
          %v722 = vld [vmem:[%s306] sm:$0xf]
          %v723 = vld [vmem:[%s306 + $0x4] sm:$0xf]
          %v724 = vld [vmem:[%s306 + $0x8] sm:$0xf]
          %v725 = vld [vmem:[%s306 + $0xc] sm:$0xf]
          %v726 = vld [vmem:[%s306 + $0x10] sm:$0xf]
          %v727 = vld [vmem:[%s306 + $0x14] sm:$0xf]
          %v728 = vld [vmem:[%s306 + $0x18] sm:$0xf]
          %v729 = vld [vmem:[%s306 + $0x1c] sm:$0xf]
          %v730 = vld [vmem:[%s306 + $0x20] sm:$0xf]
          %v731 = vld [vmem:[%s306 + $0x24] sm:$0xf]
          %v732 = vld [vmem:[%s306 + $0x28] sm:$0xf]
          %v733 = vld [vmem:[%s306 + $0x2c] sm:$0xf]
          %v734 = vld [vmem:[%s306 + $0x30] sm:$0xf]
          %v735 = vld [vmem:[%s306 + $0x34] sm:$0xf]
          %v736 = vld [vmem:[%s306 + $0x38] sm:$0xf]
          %v737 = vld [vmem:[%s306 + $0x3c] sm:$0xf]
          %v738 = vunpack.c.l.bf16 %v722
          %v739 = vunpack.c.l.bf16 %v723
          %v740 = vunpack.c.l.bf16 %v724
          %v741 = vunpack.c.l.bf16 %v725
          %v742 = vunpack.c.l.bf16 %v726
          %v743 = vunpack.c.l.bf16 %v727
          %v744 = vunpack.c.l.bf16 %v728
          %v745 = vunpack.c.l.bf16 %v729
          %v746 = vunpack.c.l.bf16 %v730
          %v747 = vunpack.c.l.bf16 %v731
          %v748 = vunpack.c.l.bf16 %v732
          %v749 = vunpack.c.l.bf16 %v733
          %v750 = vunpack.c.l.bf16 %v734
          %v751 = vunpack.c.l.bf16 %v735
          %v752 = vunpack.c.l.bf16 %v736
          %v753 = vunpack.c.l.bf16 %v737
          %v754 = vadd.f32 %v706, %v738
          %v755 = vadd.f32 %v707, %v739
          %v756 = vadd.f32 %v708, %v740
          %v757 = vadd.f32 %v709, %v741
          %v758 = vadd.f32 %v710, %v742
          %v759 = vadd.f32 %v711, %v743
          %v760 = vadd.f32 %v712, %v744
          %v761 = vadd.f32 %v713, %v745
          %v762 = vadd.f32 %v714, %v746
          %v763 = vadd.f32 %v715, %v747
          %v764 = vadd.f32 %v716, %v748
          %v765 = vadd.f32 %v717, %v749
          %v766 = vadd.f32 %v718, %v750
          %v767 = vadd.f32 %v719, %v751
          %v768 = vadd.f32 %v720, %v752
          %v769 = vadd.f32 %v721, %v753
          %v770 = vld [vmem:[%s3] sm:$0x1]
          %v772 = vlaneseq
          %v773 = vshrl.u32 %v772, 7
          %v774 = vsub.s32 0, %v773
          %v775 = vrot.slane %v770, %v774
          %v777 = vadd.f32 %v754, %v775
          %v778 = vadd.f32 %v755, %v775
          %v779 = vadd.f32 %v756, %v775
          %v780 = vadd.f32 %v757, %v775
          %v781 = vadd.f32 %v758, %v775
          %v782 = vadd.f32 %v759, %v775
          %v783 = vadd.f32 %v760, %v775
          %v784 = vadd.f32 %v761, %v775
          %v785 = vadd.f32 %v762, %v775
          %v786 = vadd.f32 %v763, %v775
          %v787 = vadd.f32 %v764, %v775
          %v788 = vadd.f32 %v765, %v775
          %v789 = vadd.f32 %v766, %v775
          %v790 = vadd.f32 %v767, %v775
          %v791 = vadd.f32 %v768, %v775
          %v792 = vadd.f32 %v769, %v775
          %793 = vst [vmem:[%s275] sm:$0xff] %v777
          %794 = vst [vmem:[%s275 + $0x8] sm:$0xff] %v778
          %795 = vst [vmem:[%s275 + $0x10] sm:$0xff] %v779
          %796 = vst [vmem:[%s275 + $0x18] sm:$0xff] %v780
          %797 = vst [vmem:[%s275 + $0x20] sm:$0xff] %v781
          %798 = vst [vmem:[%s275 + $0x28] sm:$0xff] %v782
          %799 = vst [vmem:[%s275 + $0x30] sm:$0xff] %v783
          %800 = vst [vmem:[%s275 + $0x38] sm:$0xff] %v784
          %801 = vst [vmem:[%s275 + $0x40] sm:$0xff] %v785
          %802 = vst [vmem:[%s275 + $0x48] sm:$0xff] %v786
          %803 = vst [vmem:[%s275 + $0x50] sm:$0xff] %v787
          %804 = vst [vmem:[%s275 + $0x58] sm:$0xff] %v788
          %805 = vst [vmem:[%s275 + $0x60] sm:$0xff] %v789
          %806 = vst [vmem:[%s275 + $0x68] sm:$0xff] %v790
          %807 = vst [vmem:[%s275 + $0x70] sm:$0xff] %v791
          %808 = vst [vmem:[%s275 + $0x78] sm:$0xff] %v792
        $region44: #{rgcn_forward.5} parent=35 // pred_fallthru
          _
        %s809 = sand.u32 %s150, 1
        %s810 = scalar_lea.sflag [#allocation4], %s809
        %s811 = sand.u32 %s150, 1
        %s812 = smul.addr %s811, 128
        %s813 = scalar_lea.vmem [#allocation3], %s812
        // Predicated region
        $region45: #{rgcn_forward.5} parent=35 // pred_check
          %p814 = pneg %p160
        $region46: #{rgcn_forward.5} parent=35 // pred_check_branch
          %816 = sbr.rel (%p814) target = $region48
        $region47: #{rgcn_forward.5} parent=35 // pred_region
          %s817 = smul.u32 16, %s23
          %s819 = ssub.s32 2048, 2048
          %820 = vsyncadd %s810, %s819
          %s821 = smul.addr %s817, 128
          %s822 = scalar_lea.hbm %s4, %s821
          %s823 = sshll.u32 %s813, 4
          %s824 = int_to_ptr.vmem [resolvable:$true] %s823
          %829 = dma.vmem_to_hbm [thread:$0]  %s824, 2048, %s822, %s810, 128, 128, 8
        $region48: #{rgcn_forward.5} parent=35 // pred_fallthru
          _
      $region36: #{rgcn_forward.5} parent=5 // pred_fallthru
        _
      %p830 = scmp.le.s32.totalorder 2, %s13
      // Predicated region
      $region49: #{rgcn_forward.5} parent=5 // pred_check
        %p831 = pneg %p830
      $region50: #{rgcn_forward.5} parent=5 // pred_check_branch
        %833 = sbr.rel (%p831) target = $region52
      $region51: #{rgcn_forward.5} parent=5 // pred_region
        %s834 = ssub.s32 %s13, 2
        // Predicated region
        $region53: #{rgcn_forward.5} parent=51 // pred_check
          %p835 = pneg %p166
        $region54: #{rgcn_forward.5} parent=51 // pred_check_branch
          %837 = sbr.rel (%p835) target = $region56
        $region55: #{rgcn_forward.5} parent=51 // pred_region
          %s838 = sand.u32 %s151, 1
          %s839 = scalar_lea.sflag [#allocation4], %s838
          %s840 = sand.u32 %s151, 1
          %s841 = smul.addr %s840, 128
          %s842 = scalar_lea.vmem [#allocation3], %s841
          %843 = dma.done %s839, 2048
        $region56: #{rgcn_forward.5} parent=51 // pred_fallthru
          _
      $region52: #{rgcn_forward.5} parent=5 // pred_fallthru
        _
    $region6: #{rgcn_forward.5} parent=1 // loop_footer
      %s17 = sadd.s32 1, %s13
    $region7: #{rgcn_forward.5} parent=1 // loop_footer_branch
      %12 = sbr.rel target = $region3
    $region8: #{rgcn_forward.5} parent=1 // loop_exit
      _
    %844 = vsyncpa [#allocation4], 1
    %s845 = scalar_lea.sflag [#allocation4], 1
    %846 = vsyncpa %s845, 1

</llo_original>
